<compile_context>
chip_gen: v7x
topology: tpu7x:2x2x1
jax: 0.10.0
libtpu: 0.0.40
codegen_flags: <defaults>
</compile_context>

<pallas_src>
import jax
import jax.numpy as jnp
from jax.experimental import pallas as pl
from jax.experimental.pallas import tpu as pltpu


def _round_up(x, m):
    return (x + m - 1) // m * m


def _choose_tm(n):
    """Adaptive batch tile: multiple of 16 (bf16 sublane tile), small for tiny
    batches, >=2 grid steps for moderate ones (v7x dual-TC), large for big N."""
    if n <= 16:
        return 16
    if n <= 1024:
        tm = _round_up(pl.cdiv(n, 2), 16)   # at least 2 grid steps
        return min(tm, 256)
    return 512


def prepare_autoencoder_params(w_enc, b_enc, w_dec, b_dec):
    """Pad to lane multiples of 128 and cast weights to bf16. Call ONCE at
    init (hoisted out of the per-forward path) and reuse the returned buffers.

    Zero padding is exact: padded hidden columns see zero weight + zero bias,
    ReLU(0)=0, and flow through zero decoder rows.
    """
    d, hid = w_enc.shape
    assert w_dec.shape == (hid, d)
    dp = _round_up(d, 128)
    hp = _round_up(hid, 128)

    wep = jnp.zeros((dp, hp), jnp.bfloat16).at[:d, :hid].set(
        w_enc.astype(jnp.bfloat16))
    bep = jnp.zeros((1, hp), jnp.float32).at[:, :hid].set(
        b_enc.reshape(1, hid).astype(jnp.float32))
    wdp = jnp.zeros((hp, dp), jnp.bfloat16).at[:hid, :d].set(
        w_dec.astype(jnp.bfloat16))
    bdp = jnp.zeros((1, dp), jnp.float32).at[:, :d].set(
        b_dec.reshape(1, d).astype(jnp.float32))
    return wep, bep, wdp, bdp


def _autoencoder_kernel(x_ref, we_ref, be_ref, wd_ref, bd_ref, o_ref):
    # x_ref : (TM, Dp)  f32  flattened input tile (cast to bf16 in-kernel)
    # we_ref: (Dp, Hp)  bf16 encoder weight (stored transposed vs. torch Linear)
    # be_ref: (1,  Hp)  f32  encoder bias
    # wd_ref: (Hp, Dp)  bf16 decoder weight
    # bd_ref: (1,  Dp)  f32  decoder bias
    # o_ref : (TM, Dp)  bf16/f32 reconstructed output tile
    x = x_ref[...].astype(jnp.bfloat16)  # VPU cast; rides under DMA/MXU slack

    # encoder: Linear + ReLU   (MXU bf16 matmul, f32 accumulation)
    h = jnp.dot(x, we_ref[...], preferred_element_type=jnp.float32) + be_ref[...]
    h = jnp.maximum(h, 0.0)

    # decoder: Linear + Sigmoid
    y = jnp.dot(h.astype(jnp.bfloat16), wd_ref[...],
                preferred_element_type=jnp.float32) + bd_ref[...]
    # sigmoid = 1 / (1 + exp(-y)): exp on the EUP, approx reciprocal (free-ish).
    sig = pl.reciprocal(1.0 + jnp.exp(-y), approx=True)
    o_ref[...] = sig.astype(o_ref.dtype)


def autoencoder_forward(x_nchw, wep, bep, wdp, bdp, *, out_dtype=jnp.bfloat16):
    """x_nchw: (N, C, H, W) float32. Params are the *prepared* padded buffers
    from prepare_autoencoder_params. Returns (N, C, H, W) reconstruction."""
    n, c, h, w = x_nchw.shape
    d = c * h * w
    dp, hp = wep.shape
    assert wdp.shape == (hp, dp)

    x_flat = x_nchw.reshape(n, d)  # row-major flatten == torch.flatten
    if d == dp:
        x_in = x_flat              # no materialized padded copy of x
    else:
        # K-dim padding must be explicit zeros (would otherwise contaminate
        # valid outputs through the matmul).
        x_in = jnp.zeros((n, dp), x_flat.dtype).at[:, :d].set(x_flat)

    tm = _choose_tm(n)
    grid = (pl.cdiv(n, tm),)       # ragged last block handled by Pallas;
                                   # garbage rows only affect dropped rows.

    cost = pl.CostEstimate(
        flops=4 * n * dp * hp,                      # two matmuls, 2*M*K*N each
        transcendentals=2 * n * dp,                 # exp + reciprocal per elem
        bytes_accessed=(n * dp * 4                  # x read (f32)
                        + n * dp * jnp.dtype(out_dtype).itemsize  # out write
                        + 2 * dp * hp * 2           # both bf16 weights
                        + (hp + dp) * 4),           # biases
    )

    out_flat = pl.pallas_call(
        _autoencoder_kernel,
        out_shape=jax.ShapeDtypeStruct((n, dp), out_dtype),
        grid_spec=pltpu.PrefetchScalarGridSpec(
            num_scalar_prefetch=0,
            grid=grid,
            in_specs=[
                pl.BlockSpec((tm, dp), lambda i: (i, 0)),   # x tile (pipelined)
                pl.BlockSpec((dp, hp), lambda i: (0, 0)),   # enc weight (resident)
                pl.BlockSpec((1, hp), lambda i: (0, 0)),    # enc bias
                pl.BlockSpec((hp, dp), lambda i: (0, 0)),   # dec weight (resident)
                pl.BlockSpec((1, dp), lambda i: (0, 0)),    # dec bias
            ],
            out_specs=pl.BlockSpec((tm, dp), lambda i: (i, 0)),
        ),
        compiler_params=pltpu.CompilerParams(
            dimension_semantics=("parallel",),
        ),
        cost_estimate=cost,
    )(x_in, wep, bep, wdp, bdp)

    return out_flat[:, :d].reshape(n, c, h, w)


def _reference_forward(x_nchw, w_enc, b_enc, w_dec, b_dec):
    n = x_nchw.shape[0]
    x = x_nchw.reshape(n, -1)
    h = jnp.maximum(x @ w_enc + b_enc, 0.0)
    y = jax.nn.sigmoid(h @ w_dec + b_dec)
    return y.reshape(x_nchw.shape)


if __name__ == "__main__":
    # Small deterministic shapes: batch=2, channels=4, spatial=16x16, hidden=32.
    N, C, H, W = 2, 4, 16, 16
    D = C * H * W          # 1024
    HIDDEN = 32

    key = jax.random.PRNGKey(0)
    k_x, k_we, k_be, k_wd, k_bd = jax.random.split(key, 5)

    x = jax.random.normal(k_x, (N, C, H, W), dtype=jnp.float32)
    # Deterministic param init (scaled normal, roughly Kaiming-like).
    w_enc = jax.random.normal(k_we, (D, HIDDEN), dtype=jnp.float32) * (1.0 / D) ** 0.5
    b_enc = jax.random.normal(k_be, (HIDDEN,), dtype=jnp.float32) * 0.01
    w_dec = jax.random.normal(k_wd, (HIDDEN, D), dtype=jnp.float32) * (1.0 / HIDDEN) ** 0.5
    b_dec = jax.random.normal(k_bd, (D,), dtype=jnp.float32) * 0.01

    # One-time parameter preparation (pad + bf16 cast), hoisted out of forward.
    wep, bep, wdp, bdp = prepare_autoencoder_params(w_enc, b_enc, w_dec, b_dec)
    wep, bep, wdp, bdp = jax.block_until_ready((wep, bep, wdp, bdp))

    fwd = jax.jit(autoencoder_forward)
    out = fwd(x, wep, bep, wdp, bdp)
    out = jax.block_until_ready(out)

    ref = _reference_forward(x, w_enc, b_enc, w_dec, b_dec)
    assert out.shape == (N, C, H, W)
    # bf16 matmul operands + bf16 output + approx reciprocal vs. f32 reference
    # -> relaxed tolerance (sigmoid output in [0,1]).
    assert jnp.allclose(out.astype(jnp.float32), ref, atol=2e-2, rtol=2e-2), \
        "mismatch vs reference"

    print("KERNEL_OK")
</pallas_src>

<mosaic_0001>
module attributes {stable_mosaic.version = 11 : i64} {
  func.func @_autoencoder_kernel(%arg0: i32, %arg1: memref<16x1024xf32, #tpu.memory_space<vmem>>, %arg2: memref<1024x128xbf16, #tpu.memory_space<vmem>>, %arg3: memref<1x128xf32, #tpu.memory_space<vmem>>, %arg4: memref<128x1024xbf16, #tpu.memory_space<vmem>>, %arg5: memref<1x1024xf32, #tpu.memory_space<vmem>>, %arg6: memref<16x1024xbf16, #tpu.memory_space<vmem>>) attributes {dimension_semantics = [#tpu.dimension_semantics<parallel>], iteration_bounds = array<i64: 1>, scalar_prefetch = 0 : i64, scratch_operands = 0 : i64, tpu.core_type = #tpu.core_type<tc>, window_params = [{transform_indices = @transform_0, window_bounds = array<i64: 16, 1024>}, {pipeline_mode = #tpu.pipeline_mode<synchronous>, transform_indices = @transform_1, window_bounds = array<i64: 1024, 128>}, {pipeline_mode = #tpu.pipeline_mode<synchronous>, transform_indices = @transform_2, window_bounds = array<i64: 1, 128>}, {pipeline_mode = #tpu.pipeline_mode<synchronous>, transform_indices = @transform_3, window_bounds = array<i64: 128, 1024>}, {pipeline_mode = #tpu.pipeline_mode<synchronous>, transform_indices = @transform_4, window_bounds = array<i64: 1, 1024>}, {transform_indices = @transform_5, window_bounds = array<i64: 16, 1024>}]} {
    %c0 = arith.constant 0 : index
    %c0_0 = arith.constant 0 : index
    %0 = vector.load %arg1[%c0, %c0_0] : memref<16x1024xf32, #tpu.memory_space<vmem>>, vector<16x1024xf32>
    %1 = arith.truncf %0 : vector<16x1024xf32> to vector<16x1024xbf16>
    %c0_1 = arith.constant 0 : index
    %c0_2 = arith.constant 0 : index
    %2 = vector.load %arg2[%c0_1, %c0_2] : memref<1024x128xbf16, #tpu.memory_space<vmem>>, vector<1024x128xbf16>
    %cst = arith.constant dense<0.000000e+00> : vector<16x128xf32>
    %3 = tpu.matmul %1, %2, %cst {dimension_numbers = #tpu.dot_dimension_numbers<[1], [0], [0], [1], [0, 0, 1, 1], [], []>} : vector<16x1024xbf16>, vector<1024x128xbf16>, vector<16x128xf32> -> vector<16x128xf32>
    %c0_3 = arith.constant 0 : index
    %c0_4 = arith.constant 0 : index
    %4 = vector.load %arg3[%c0_3, %c0_4] : memref<1x128xf32, #tpu.memory_space<vmem>>, vector<1x128xf32>
    %5 = vector.broadcast %4 : vector<1x128xf32> to vector<16x128xf32>
    %6 = arith.addf %3, %5 : vector<16x128xf32>
    %cst_5 = arith.constant 0.000000e+00 : f32
    %7 = vector.broadcast %cst_5 : f32 to vector<16x128xf32>
    %8 = arith.maximumf %6, %7 : vector<16x128xf32>
    %9 = arith.truncf %8 : vector<16x128xf32> to vector<16x128xbf16>
    %c0_6 = arith.constant 0 : index
    %c0_7 = arith.constant 0 : index
    %10 = vector.load %arg4[%c0_6, %c0_7] : memref<128x1024xbf16, #tpu.memory_space<vmem>>, vector<128x1024xbf16>
    %cst_8 = arith.constant dense<0.000000e+00> : vector<16x1024xf32>
    %11 = tpu.matmul %9, %10, %cst_8 {dimension_numbers = #tpu.dot_dimension_numbers<[1], [0], [0], [1], [0, 0, 1, 1], [], []>} : vector<16x128xbf16>, vector<128x1024xbf16>, vector<16x1024xf32> -> vector<16x1024xf32>
    %c0_9 = arith.constant 0 : index
    %c0_10 = arith.constant 0 : index
    %12 = vector.load %arg5[%c0_9, %c0_10] : memref<1x1024xf32, #tpu.memory_space<vmem>>, vector<1x1024xf32>
    %13 = vector.broadcast %12 : vector<1x1024xf32> to vector<16x1024xf32>
    %14 = arith.addf %11, %13 : vector<16x1024xf32>
    %cst_11 = arith.constant 0.000000e+00 : f32
    %15 = vector.broadcast %cst_11 : f32 to vector<16x1024xf32>
    %16 = arith.subf %15, %14 : vector<16x1024xf32>
    %17 = math.exp %16 : vector<16x1024xf32>
    %cst_12 = arith.constant 1.000000e+00 : f32
    %18 = vector.broadcast %cst_12 : f32 to vector<16x1024xf32>
    %19 = arith.addf %18, %17 : vector<16x1024xf32>
    %20 = tpu.reciprocal %19 {approx = true} : vector<16x1024xf32> -> vector<16x1024xf32>
    %21 = arith.truncf %20 : vector<16x1024xf32> to vector<16x1024xbf16>
    %c0_13 = arith.constant 0 : index
    %c0_14 = arith.constant 0 : index
    %22 = vector.load %arg6[%c0_13, %c0_14] : memref<16x1024xbf16, #tpu.memory_space<vmem>>, vector<16x1024xbf16>
    tpu.vector_store %arg6[%c0_13, %c0_14], %21 {strides = array<i32>} : memref<16x1024xbf16, #tpu.memory_space<vmem>>, vector<16x1024xbf16>,
    return
  }
  func.func @transform_0(%arg0: i32) -> (i32, i32) {
    %c0_i32 = arith.constant 0 : i32
    %c0_i32_0 = arith.constant 0 : i32
    return %arg0, %c0_i32 : i32, i32
  }
  func.func @transform_1(%arg0: i32) -> (i32, i32) {
    %c0_i32 = arith.constant 0 : i32
    %c0_i32_0 = arith.constant 0 : i32
    %c0_i32_1 = arith.constant 0 : i32
    return %c0_i32, %c0_i32_0 : i32, i32
  }
  func.func @transform_2(%arg0: i32) -> (i32, i32) {
    %c0_i32 = arith.constant 0 : i32
    %c0_i32_0 = arith.constant 0 : i32
    %c0_i32_1 = arith.constant 0 : i32
    return %c0_i32, %c0_i32_0 : i32, i32
  }
  func.func @transform_3(%arg0: i32) -> (i32, i32) {
    %c0_i32 = arith.constant 0 : i32
    %c0_i32_0 = arith.constant 0 : i32
    %c0_i32_1 = arith.constant 0 : i32
    return %c0_i32, %c0_i32_0 : i32, i32
  }
  func.func @transform_4(%arg0: i32) -> (i32, i32) {
    %c0_i32 = arith.constant 0 : i32
    %c0_i32_0 = arith.constant 0 : i32
    %c0_i32_1 = arith.constant 0 : i32
    return %c0_i32, %c0_i32_0 : i32, i32
  }
  func.func @transform_5(%arg0: i32) -> (i32, i32) {
    %c0_i32 = arith.constant 0 : i32
    %c0_i32_0 = arith.constant 0 : i32
    return %arg0, %c0_i32 : i32, i32
  }
}

</mosaic_0001>

<llo_original>
// kernel: autoencoder_forward.1
$region0: #{autoencoder_forward.1}
  #allocation0 [shape = 'u32[]', space=smem, size = 0x4, offset = 0x4, fixed_abs, tag = 'smem constant byte address 0x4 - core index']
  #allocation1 [shape = 'u32[144,128]{1,0:T(1,128)}', space=vmem, size = 0x12000, scoped, tag = 'internal scratch']
  %s0 = inlined_call_operand.vmem [shape: f32[2,1024], index: 0, kind: input, shape index: {}]
  %s1 = inlined_call_operand.hbm [shape: bf16[1024,128], index: 1, kind: input, shape index: {}]
  %s2 = inlined_call_operand.vmem [shape: f32[1,128], index: 2, kind: input, shape index: {}]
  %s3 = inlined_call_operand.hbm [shape: bf16[128,1024], index: 3, kind: input, shape index: {}]
  %s4 = inlined_call_operand.vmem [shape: f32[1,1024], index: 4, kind: input, shape index: {}]
  %s5 = inlined_call_operand.vmem [shape: bf16[2,1024], index: 5, kind: output, shape index: {}]
  %s6 = sld [smem:[#allocation0]]
  $region72: #{autoencoder_forward.1} parent=0
    _
  %s8 = ssub.s32 1, %s6
  %s9 = scalar_select 0, %s8, %s6
  $region1: #{autoencoder_forward.1} parent=0
    #allocation2 [shape = 'u8[262144]{0}', space=vmem, size = 0x40000, scoped, tag = 'input window, operand 1, single buffered']
    #allocation3 [shape = 's32[1]{0}', space=sflag, size = 0x4, scoped, tag = 'scoped memory for autoencoder_forward.1']
    #allocation4 [shape = 'u8[262144]{0}', space=vmem, size = 0x40000, scoped, tag = 'input window, operand 3, single buffered']
    #allocation5 [shape = 's32[1]{0}', space=sflag, size = 0x4, scoped, tag = 'scoped memory for autoencoder_forward.1']
    #allocation6 [shape = 'u8[32768]{0}', space=vmem, size = 0x8000, scoped, tag = 'output window, operand 0, single buffered']
    %10 = vsyncpa [#allocation3], 0
    %11 = vsyncpa [#allocation5], 0
    // Predicated region
    $region2: #{autoencoder_forward.1} parent=1 // pred_check
      _
    $region3: #{autoencoder_forward.1} parent=1 // pred_check_branch
      %13 = sbr.rel (0) target = $region5
    $region4: #{autoencoder_forward.1} parent=1 // pred_region
      _
    $region5: #{autoencoder_forward.1} parent=1 // pred_fallthru
      _
    // Predicated region
    $region6: #{autoencoder_forward.1} parent=1 // pred_check
      _
    $region7: #{autoencoder_forward.1} parent=1 // pred_check_branch
      %15 = sbr.rel (0) target = $region9
    $region8: #{autoencoder_forward.1} parent=1 // pred_region
      %s17 = ssub.s32 8192, 8192
      %18 = vsyncadd [#allocation3], %s17
      %s19 = sshll.u32 [#allocation2], 4
      %s20 = int_to_ptr.vmem [resolvable:$true] %s19
      %25 = dma.hbm_to_vmem [thread:$0]  %s1, 8192, %s20, [#allocation3], 64, 64, 4
    $region9: #{autoencoder_forward.1} parent=1 // pred_fallthru
      _
    // Predicated region
    $region10: #{autoencoder_forward.1} parent=1 // pred_check
      _
    $region11: #{autoencoder_forward.1} parent=1 // pred_check_branch
      %27 = sbr.rel (0) target = $region13
    $region12: #{autoencoder_forward.1} parent=1 // pred_region
      _
    $region13: #{autoencoder_forward.1} parent=1 // pred_fallthru
      _
    // Predicated region
    $region14: #{autoencoder_forward.1} parent=1 // pred_check
      _
    $region15: #{autoencoder_forward.1} parent=1 // pred_check_branch
      %29 = sbr.rel (0) target = $region17
    $region16: #{autoencoder_forward.1} parent=1 // pred_region
      %s31 = ssub.s32 8192, 8192
      %32 = vsyncadd [#allocation5], %s31
      %s33 = sshll.u32 [#allocation4], 4
      %s34 = int_to_ptr.vmem [resolvable:$true] %s33
      %39 = dma.hbm_to_vmem [thread:$0]  %s3, 8192, %s34, [#allocation5], 512, 512, 32
    $region17: #{autoencoder_forward.1} parent=1 // pred_fallthru
      _
    // Predicated region
    $region18: #{autoencoder_forward.1} parent=1 // pred_check
      _
    $region19: #{autoencoder_forward.1} parent=1 // pred_check_branch
      %41 = sbr.rel (0) target = $region21
    $region20: #{autoencoder_forward.1} parent=1 // pred_region
      _
    $region21: #{autoencoder_forward.1} parent=1 // pred_fallthru
      _
    // Predicated region
    $region22: #{autoencoder_forward.1} parent=1 // pred_check
      _
    $region23: #{autoencoder_forward.1} parent=1 // pred_check_branch
      %43 = sbr.rel (0) target = $region25
    $region24: #{autoencoder_forward.1} parent=1 // pred_region
      %44 = dma.done [#allocation3], 8192
    $region25: #{autoencoder_forward.1} parent=1 // pred_fallthru
      _
    // Predicated region
    $region26: #{autoencoder_forward.1} parent=1 // pred_check
      _
    $region27: #{autoencoder_forward.1} parent=1 // pred_check_branch
      %46 = sbr.rel (0) target = $region29
    $region28: #{autoencoder_forward.1} parent=1 // pred_region
      %47 = dma.done [#allocation5], 8192
    $region29: #{autoencoder_forward.1} parent=1 // pred_fallthru
      _
    %v49 = vld [vmem:[%s0] sm:$0xff]
    %v50 = vld [vmem:[%s0 + $0x8] sm:$0xff]
    %v51 = vld [vmem:[%s0 + $0x10] sm:$0xff]
    %v52 = vld [vmem:[%s0 + $0x18] sm:$0xff]
    %v53 = vld [vmem:[%s0 + $0x20] sm:$0xff]
    %v54 = vld [vmem:[%s0 + $0x28] sm:$0xff]
    %v55 = vld [vmem:[%s0 + $0x30] sm:$0xff]
    %v56 = vld [vmem:[%s0 + $0x38] sm:$0xff]
    %v57 = vld [vmem:[%s0 + $0x40] sm:$0xff]
    %v58 = vld [vmem:[%s0 + $0x48] sm:$0xff]
    %v59 = vld [vmem:[%s0 + $0x50] sm:$0xff]
    %v60 = vld [vmem:[%s0 + $0x58] sm:$0xff]
    %v61 = vld [vmem:[%s0 + $0x60] sm:$0xff]
    %v62 = vld [vmem:[%s0 + $0x68] sm:$0xff]
    %v63 = vld [vmem:[%s0 + $0x70] sm:$0xff]
    %v64 = vld [vmem:[%s0 + $0x78] sm:$0xff]
    %v81 = vcombine.low %v49, %v51
    %v82 = vcombine.high %v49, %v51
    %v83 = vcombine.low %v53, %v55
    %v84 = vcombine.high %v53, %v55
    %v86 = vunpack.c.l.s4 1983009808
    %v87 = vunpack.c.0.s8 %v86
    %v88 = vlaneseq
    %v89 = vshrl.u32 %v88, 7
    %v90 = vsub.s32 %v87, %v89
    %v91 = vrot.slane %v81, %v90
    %v93 = vunpack.c.l.s4 1983009808
    %v94 = vunpack.c.0.s8 %v93
    %v95 = vlaneseq
    %v96 = vshrl.u32 %v95, 7
    %v97 = vsub.s32 %v94, %v96
    %v98 = vrot.slane %v82, %v97
    %v100 = vunpack.c.l.s4 1983009808
    %v101 = vunpack.c.0.s8 %v100
    %v102 = vlaneseq
    %v103 = vshrl.u32 %v102, 7
    %v104 = vsub.s32 %v101, %v103
    %v105 = vrot.slane %v83, %v104
    %v107 = vunpack.c.l.s4 1983009808
    %v108 = vunpack.c.0.s8 %v107
    %v109 = vlaneseq
    %v110 = vshrl.u32 %v109, 7
    %v111 = vsub.s32 %v108, %v110
    %v112 = vrot.slane %v84, %v111
    %v113 = vcombine.low %v91, %v105
    %v114 = vcombine.high %v91, %v105
    %v115 = vcombine.low %v98, %v112
    %v116 = vcombine.high %v98, %v112
    %v117 = vcombine.low %v50, %v52
    %v118 = vcombine.high %v50, %v52
    %v119 = vcombine.low %v54, %v56
    %v120 = vcombine.high %v54, %v56
    %v122 = vunpack.c.l.s4 1983009808
    %v123 = vunpack.c.0.s8 %v122
    %v124 = vlaneseq
    %v125 = vshrl.u32 %v124, 7
    %v126 = vsub.s32 %v123, %v125
    %v127 = vrot.slane %v117, %v126
    %v129 = vunpack.c.l.s4 1983009808
    %v130 = vunpack.c.0.s8 %v129
    %v131 = vlaneseq
    %v132 = vshrl.u32 %v131, 7
    %v133 = vsub.s32 %v130, %v132
    %v134 = vrot.slane %v118, %v133
    %v136 = vunpack.c.l.s4 1983009808
    %v137 = vunpack.c.0.s8 %v136
    %v138 = vlaneseq
    %v139 = vshrl.u32 %v138, 7
    %v140 = vsub.s32 %v137, %v139
    %v141 = vrot.slane %v119, %v140
    %v143 = vunpack.c.l.s4 1983009808
    %v144 = vunpack.c.0.s8 %v143
    %v145 = vlaneseq
    %v146 = vshrl.u32 %v145, 7
    %v147 = vsub.s32 %v144, %v146
    %v148 = vrot.slane %v120, %v147
    %v149 = vcombine.low %v127, %v141
    %v150 = vcombine.high %v127, %v141
    %v151 = vcombine.low %v134, %v148
    %v152 = vcombine.high %v134, %v148
    %v153 = vcombine.low %v57, %v59
    %v154 = vcombine.high %v57, %v59
    %v155 = vcombine.low %v61, %v63
    %v156 = vcombine.high %v61, %v63
    %v158 = vunpack.c.l.s4 1983009808
    %v159 = vunpack.c.0.s8 %v158
    %v160 = vlaneseq
    %v161 = vshrl.u32 %v160, 7
    %v162 = vsub.s32 %v159, %v161
    %v163 = vrot.slane %v153, %v162
    %v165 = vunpack.c.l.s4 1983009808
    %v166 = vunpack.c.0.s8 %v165
    %v167 = vlaneseq
    %v168 = vshrl.u32 %v167, 7
    %v169 = vsub.s32 %v166, %v168
    %v170 = vrot.slane %v154, %v169
    %v172 = vunpack.c.l.s4 1983009808
    %v173 = vunpack.c.0.s8 %v172
    %v174 = vlaneseq
    %v175 = vshrl.u32 %v174, 7
    %v176 = vsub.s32 %v173, %v175
    %v177 = vrot.slane %v155, %v176
    %v179 = vunpack.c.l.s4 1983009808
    %v180 = vunpack.c.0.s8 %v179
    %v181 = vlaneseq
    %v182 = vshrl.u32 %v181, 7
    %v183 = vsub.s32 %v180, %v182
    %v184 = vrot.slane %v156, %v183
    %v185 = vcombine.low %v163, %v177
    %v186 = vcombine.high %v163, %v177
    %v187 = vcombine.low %v170, %v184
    %v188 = vcombine.high %v170, %v184
    %v189 = vcombine.low %v58, %v60
    %v190 = vcombine.high %v58, %v60
    %v191 = vcombine.low %v62, %v64
    %v192 = vcombine.high %v62, %v64
    %v194 = vunpack.c.l.s4 1983009808
    %v195 = vunpack.c.0.s8 %v194
    %v196 = vlaneseq
    %v197 = vshrl.u32 %v196, 7
    %v198 = vsub.s32 %v195, %v197
    %v199 = vrot.slane %v189, %v198
    %v201 = vunpack.c.l.s4 1983009808
    %v202 = vunpack.c.0.s8 %v201
    %v203 = vlaneseq
    %v204 = vshrl.u32 %v203, 7
    %v205 = vsub.s32 %v202, %v204
    %v206 = vrot.slane %v190, %v205
    %v208 = vunpack.c.l.s4 1983009808
    %v209 = vunpack.c.0.s8 %v208
    %v210 = vlaneseq
    %v211 = vshrl.u32 %v210, 7
    %v212 = vsub.s32 %v209, %v211
    %v213 = vrot.slane %v191, %v212
    %v215 = vunpack.c.l.s4 1983009808
    %v216 = vunpack.c.0.s8 %v215
    %v217 = vlaneseq
    %v218 = vshrl.u32 %v217, 7
    %v219 = vsub.s32 %v216, %v218
    %v220 = vrot.slane %v192, %v219
    %v221 = vcombine.low %v199, %v213
    %v222 = vcombine.high %v199, %v213
    %v223 = vcombine.low %v206, %v220
    %v224 = vcombine.high %v206, %v220
    %v241 = vpack.c.bf16 %v185, %v113
    %v242 = vpack.c.bf16 %v186, %v114
    %v243 = vpack.c.bf16 %v187, %v115
    %v244 = vpack.c.bf16 %v188, %v116
    %v245 = vpack.c.bf16 %v221, %v149
    %v246 = vpack.c.bf16 %v222, %v150
    %v247 = vpack.c.bf16 %v223, %v151
    %v248 = vpack.c.bf16 %v224, %v152
    %v249 = vld [vmem:[#allocation2] sm:$0xf]
    %v250 = vld [vmem:[#allocation2 + $0x4] sm:$0xf]
    %v251 = vld [vmem:[#allocation2 + $0x8] sm:$0xf]
    %v252 = vld [vmem:[#allocation2 + $0xc] sm:$0xf]
    %v253 = vld [vmem:[#allocation2 + $0x10] sm:$0xf]
    %v254 = vld [vmem:[#allocation2 + $0x14] sm:$0xf]
    %v255 = vld [vmem:[#allocation2 + $0x18] sm:$0xf]
    %v256 = vld [vmem:[#allocation2 + $0x1c] sm:$0xf]
    %v257 = vld [vmem:[#allocation2 + $0x20] sm:$0xf]
    %v258 = vld [vmem:[#allocation2 + $0x24] sm:$0xf]
    %v259 = vld [vmem:[#allocation2 + $0x28] sm:$0xf]
    %v260 = vld [vmem:[#allocation2 + $0x2c] sm:$0xf]
    %v261 = vld [vmem:[#allocation2 + $0x30] sm:$0xf]
    %v262 = vld [vmem:[#allocation2 + $0x34] sm:$0xf]
    %v263 = vld [vmem:[#allocation2 + $0x38] sm:$0xf]
    %v264 = vld [vmem:[#allocation2 + $0x3c] sm:$0xf]
    %v265 = vld [vmem:[#allocation2 + $0x40] sm:$0xf]
    %v266 = vld [vmem:[#allocation2 + $0x44] sm:$0xf]
    %v267 = vld [vmem:[#allocation2 + $0x48] sm:$0xf]
    %v268 = vld [vmem:[#allocation2 + $0x4c] sm:$0xf]
    %v269 = vld [vmem:[#allocation2 + $0x50] sm:$0xf]
    %v270 = vld [vmem:[#allocation2 + $0x54] sm:$0xf]
    %v271 = vld [vmem:[#allocation2 + $0x58] sm:$0xf]
    %v272 = vld [vmem:[#allocation2 + $0x5c] sm:$0xf]
    %v273 = vld [vmem:[#allocation2 + $0x60] sm:$0xf]
    %v274 = vld [vmem:[#allocation2 + $0x64] sm:$0xf]
    %v275 = vld [vmem:[#allocation2 + $0x68] sm:$0xf]
    %v276 = vld [vmem:[#allocation2 + $0x6c] sm:$0xf]
    %v277 = vld [vmem:[#allocation2 + $0x70] sm:$0xf]
    %v278 = vld [vmem:[#allocation2 + $0x74] sm:$0xf]
    %v279 = vld [vmem:[#allocation2 + $0x78] sm:$0xf]
    %v280 = vld [vmem:[#allocation2 + $0x7c] sm:$0xf]
    %v281 = vld [vmem:[#allocation2 + $0x80] sm:$0xf]
    %v282 = vld [vmem:[#allocation2 + $0x84] sm:$0xf]
    %v283 = vld [vmem:[#allocation2 + $0x88] sm:$0xf]
    %v284 = vld [vmem:[#allocation2 + $0x8c] sm:$0xf]
    %v285 = vld [vmem:[#allocation2 + $0x90] sm:$0xf]
    %v286 = vld [vmem:[#allocation2 + $0x94] sm:$0xf]
    %v287 = vld [vmem:[#allocation2 + $0x98] sm:$0xf]
    %v288 = vld [vmem:[#allocation2 + $0x9c] sm:$0xf]
    %v289 = vld [vmem:[#allocation2 + $0xa0] sm:$0xf]
    %v290 = vld [vmem:[#allocation2 + $0xa4] sm:$0xf]
    %v291 = vld [vmem:[#allocation2 + $0xa8] sm:$0xf]
    %v292 = vld [vmem:[#allocation2 + $0xac] sm:$0xf]
    %v293 = vld [vmem:[#allocation2 + $0xb0] sm:$0xf]
    %v294 = vld [vmem:[#allocation2 + $0xb4] sm:$0xf]
    %v295 = vld [vmem:[#allocation2 + $0xb8] sm:$0xf]
    %v296 = vld [vmem:[#allocation2 + $0xbc] sm:$0xf]
    %v297 = vld [vmem:[#allocation2 + $0xc0] sm:$0xf]
    %v298 = vld [vmem:[#allocation2 + $0xc4] sm:$0xf]
    %v299 = vld [vmem:[#allocation2 + $0xc8] sm:$0xf]
    %v300 = vld [vmem:[#allocation2 + $0xcc] sm:$0xf]
    %v301 = vld [vmem:[#allocation2 + $0xd0] sm:$0xf]
    %v302 = vld [vmem:[#allocation2 + $0xd4] sm:$0xf]
    %v303 = vld [vmem:[#allocation2 + $0xd8] sm:$0xf]
    %v304 = vld [vmem:[#allocation2 + $0xdc] sm:$0xf]
    %v305 = vld [vmem:[#allocation2 + $0xe0] sm:$0xf]
    %v306 = vld [vmem:[#allocation2 + $0xe4] sm:$0xf]
    %v307 = vld [vmem:[#allocation2 + $0xe8] sm:$0xf]
    %v308 = vld [vmem:[#allocation2 + $0xec] sm:$0xf]
    %v309 = vld [vmem:[#allocation2 + $0xf0] sm:$0xf]
    %v310 = vld [vmem:[#allocation2 + $0xf4] sm:$0xf]
    %v311 = vld [vmem:[#allocation2 + $0xf8] sm:$0xf]
    %v312 = vld [vmem:[#allocation2 + $0xfc] sm:$0xf]
    %v313 = vld [vmem:[#allocation2 + $0x100] sm:$0xf]
    %v314 = vld [vmem:[#allocation2 + $0x104] sm:$0xf]
    %v315 = vld [vmem:[#allocation2 + $0x108] sm:$0xf]
    %v316 = vld [vmem:[#allocation2 + $0x10c] sm:$0xf]
    %v317 = vld [vmem:[#allocation2 + $0x110] sm:$0xf]
    %v318 = vld [vmem:[#allocation2 + $0x114] sm:$0xf]
    %v319 = vld [vmem:[#allocation2 + $0x118] sm:$0xf]
    %v320 = vld [vmem:[#allocation2 + $0x11c] sm:$0xf]
    %v321 = vld [vmem:[#allocation2 + $0x120] sm:$0xf]
    %v322 = vld [vmem:[#allocation2 + $0x124] sm:$0xf]
    %v323 = vld [vmem:[#allocation2 + $0x128] sm:$0xf]
    %v324 = vld [vmem:[#allocation2 + $0x12c] sm:$0xf]
    %v325 = vld [vmem:[#allocation2 + $0x130] sm:$0xf]
    %v326 = vld [vmem:[#allocation2 + $0x134] sm:$0xf]
    %v327 = vld [vmem:[#allocation2 + $0x138] sm:$0xf]
    %v328 = vld [vmem:[#allocation2 + $0x13c] sm:$0xf]
    %v329 = vld [vmem:[#allocation2 + $0x140] sm:$0xf]
    %v330 = vld [vmem:[#allocation2 + $0x144] sm:$0xf]
    %v331 = vld [vmem:[#allocation2 + $0x148] sm:$0xf]
    %v332 = vld [vmem:[#allocation2 + $0x14c] sm:$0xf]
    %v333 = vld [vmem:[#allocation2 + $0x150] sm:$0xf]
    %v334 = vld [vmem:[#allocation2 + $0x154] sm:$0xf]
    %v335 = vld [vmem:[#allocation2 + $0x158] sm:$0xf]
    %v336 = vld [vmem:[#allocation2 + $0x15c] sm:$0xf]
    %v337 = vld [vmem:[#allocation2 + $0x160] sm:$0xf]
    %v338 = vld [vmem:[#allocation2 + $0x164] sm:$0xf]
    %v339 = vld [vmem:[#allocation2 + $0x168] sm:$0xf]
    %v340 = vld [vmem:[#allocation2 + $0x16c] sm:$0xf]
    %v341 = vld [vmem:[#allocation2 + $0x170] sm:$0xf]
    %v342 = vld [vmem:[#allocation2 + $0x174] sm:$0xf]
    %v343 = vld [vmem:[#allocation2 + $0x178] sm:$0xf]
    %v344 = vld [vmem:[#allocation2 + $0x17c] sm:$0xf]
    %v345 = vld [vmem:[#allocation2 + $0x180] sm:$0xf]
    %v346 = vld [vmem:[#allocation2 + $0x184] sm:$0xf]
    %v347 = vld [vmem:[#allocation2 + $0x188] sm:$0xf]
    %v348 = vld [vmem:[#allocation2 + $0x18c] sm:$0xf]
    %v349 = vld [vmem:[#allocation2 + $0x190] sm:$0xf]
    %v350 = vld [vmem:[#allocation2 + $0x194] sm:$0xf]
    %v351 = vld [vmem:[#allocation2 + $0x198] sm:$0xf]
    %v352 = vld [vmem:[#allocation2 + $0x19c] sm:$0xf]
    %v353 = vld [vmem:[#allocation2 + $0x1a0] sm:$0xf]
    %v354 = vld [vmem:[#allocation2 + $0x1a4] sm:$0xf]
    %v355 = vld [vmem:[#allocation2 + $0x1a8] sm:$0xf]
    %v356 = vld [vmem:[#allocation2 + $0x1ac] sm:$0xf]
    %v357 = vld [vmem:[#allocation2 + $0x1b0] sm:$0xf]
    %v358 = vld [vmem:[#allocation2 + $0x1b4] sm:$0xf]
    %v359 = vld [vmem:[#allocation2 + $0x1b8] sm:$0xf]
    %v360 = vld [vmem:[#allocation2 + $0x1bc] sm:$0xf]
    %v361 = vld [vmem:[#allocation2 + $0x1c0] sm:$0xf]
    %v362 = vld [vmem:[#allocation2 + $0x1c4] sm:$0xf]
    %v363 = vld [vmem:[#allocation2 + $0x1c8] sm:$0xf]
    %v364 = vld [vmem:[#allocation2 + $0x1cc] sm:$0xf]
    %v365 = vld [vmem:[#allocation2 + $0x1d0] sm:$0xf]
    %v366 = vld [vmem:[#allocation2 + $0x1d4] sm:$0xf]
    %v367 = vld [vmem:[#allocation2 + $0x1d8] sm:$0xf]
    %v368 = vld [vmem:[#allocation2 + $0x1dc] sm:$0xf]
    %v369 = vld [vmem:[#allocation2 + $0x1e0] sm:$0xf]
    %v370 = vld [vmem:[#allocation2 + $0x1e4] sm:$0xf]
    %v371 = vld [vmem:[#allocation2 + $0x1e8] sm:$0xf]
    %v372 = vld [vmem:[#allocation2 + $0x1ec] sm:$0xf]
    %v373 = vld [vmem:[#allocation2 + $0x1f0] sm:$0xf]
    %v374 = vld [vmem:[#allocation2 + $0x1f4] sm:$0xf]
    %v375 = vld [vmem:[#allocation2 + $0x1f8] sm:$0xf]
    %v376 = vld [vmem:[#allocation2 + $0x1fc] sm:$0xf]
    %v377 = vld [vmem:[%s2] sm:$0x1]
    %v379 = vlaneseq
    %v380 = vshrl.u32 %v379, 7
    %v381 = vsub.s32 0, %v380
    %v382 = vrot.slane %v377, %v381
    %v512 = vunpack.c.l.b16 %v249
    %v513 = vunpack.c.l.b16 %v250
    %v514 = vunpack.c.l.b16 %v251
    %v515 = vunpack.c.l.b16 %v252
    %v516 = vunpack.c.l.b16 %v253
    %v517 = vunpack.c.l.b16 %v254
    %v518 = vunpack.c.l.b16 %v255
    %v519 = vunpack.c.l.b16 %v256
    %v520 = vunpack.c.l.b16 %v257
    %v521 = vunpack.c.l.b16 %v258
    %v522 = vunpack.c.l.b16 %v259
    %v523 = vunpack.c.l.b16 %v260
    %v524 = vunpack.c.l.b16 %v261
    %v525 = vunpack.c.l.b16 %v262
    %v526 = vunpack.c.l.b16 %v263
    %v527 = vunpack.c.l.b16 %v264
    %v528 = vunpack.c.l.b16 %v265
    %v529 = vunpack.c.l.b16 %v266
    %v530 = vunpack.c.l.b16 %v267
    %v531 = vunpack.c.l.b16 %v268
    %v532 = vunpack.c.l.b16 %v269
    %v533 = vunpack.c.l.b16 %v270
    %v534 = vunpack.c.l.b16 %v271
    %v535 = vunpack.c.l.b16 %v272
    %v536 = vunpack.c.l.b16 %v273
    %v537 = vunpack.c.l.b16 %v274
    %v538 = vunpack.c.l.b16 %v275
    %v539 = vunpack.c.l.b16 %v276
    %v540 = vunpack.c.l.b16 %v277
    %v541 = vunpack.c.l.b16 %v278
    %v542 = vunpack.c.l.b16 %v279
    %v543 = vunpack.c.l.b16 %v280
    %v544 = vunpack.c.l.b16 %v281
    %v545 = vunpack.c.l.b16 %v282
    %v546 = vunpack.c.l.b16 %v283
    %v547 = vunpack.c.l.b16 %v284
    %v548 = vunpack.c.l.b16 %v285
    %v549 = vunpack.c.l.b16 %v286
    %v550 = vunpack.c.l.b16 %v287
    %v551 = vunpack.c.l.b16 %v288
    %v552 = vunpack.c.l.b16 %v289
    %v553 = vunpack.c.l.b16 %v290
    %v554 = vunpack.c.l.b16 %v291
    %v555 = vunpack.c.l.b16 %v292
    %v556 = vunpack.c.l.b16 %v293
    %v557 = vunpack.c.l.b16 %v294
    %v558 = vunpack.c.l.b16 %v295
    %v559 = vunpack.c.l.b16 %v296
    %v560 = vunpack.c.l.b16 %v297
    %v561 = vunpack.c.l.b16 %v298
    %v562 = vunpack.c.l.b16 %v299
    %v563 = vunpack.c.l.b16 %v300
    %v564 = vunpack.c.l.b16 %v301
    %v565 = vunpack.c.l.b16 %v302
    %v566 = vunpack.c.l.b16 %v303
    %v567 = vunpack.c.l.b16 %v304
    %v568 = vunpack.c.l.b16 %v305
    %v569 = vunpack.c.l.b16 %v306
    %v570 = vunpack.c.l.b16 %v307
    %v571 = vunpack.c.l.b16 %v308
    %v572 = vunpack.c.l.b16 %v309
    %v573 = vunpack.c.l.b16 %v310
    %v574 = vunpack.c.l.b16 %v311
    %v575 = vunpack.c.l.b16 %v312
    %v576 = vunpack.c.l.b16 %v313
    %v577 = vunpack.c.l.b16 %v314
    %v578 = vunpack.c.l.b16 %v315
    %v579 = vunpack.c.l.b16 %v316
    %v580 = vunpack.c.l.b16 %v317
    %v581 = vunpack.c.l.b16 %v318
    %v582 = vunpack.c.l.b16 %v319
    %v583 = vunpack.c.l.b16 %v320
    %v584 = vunpack.c.l.b16 %v321
    %v585 = vunpack.c.l.b16 %v322
    %v586 = vunpack.c.l.b16 %v323
    %v587 = vunpack.c.l.b16 %v324
    %v588 = vunpack.c.l.b16 %v325
    %v589 = vunpack.c.l.b16 %v326
    %v590 = vunpack.c.l.b16 %v327
    %v591 = vunpack.c.l.b16 %v328
    %v592 = vunpack.c.l.b16 %v329
    %v593 = vunpack.c.l.b16 %v330
    %v594 = vunpack.c.l.b16 %v331
    %v595 = vunpack.c.l.b16 %v332
    %v596 = vunpack.c.l.b16 %v333
    %v597 = vunpack.c.l.b16 %v334
    %v598 = vunpack.c.l.b16 %v335
    %v599 = vunpack.c.l.b16 %v336
    %v600 = vunpack.c.l.b16 %v337
    %v601 = vunpack.c.l.b16 %v338
    %v602 = vunpack.c.l.b16 %v339
    %v603 = vunpack.c.l.b16 %v340
    %v604 = vunpack.c.l.b16 %v341
    %v605 = vunpack.c.l.b16 %v342
    %v606 = vunpack.c.l.b16 %v343
    %v607 = vunpack.c.l.b16 %v344
    %v608 = vunpack.c.l.b16 %v345
    %v609 = vunpack.c.l.b16 %v346
    %v610 = vunpack.c.l.b16 %v347
    %v611 = vunpack.c.l.b16 %v348
    %v612 = vunpack.c.l.b16 %v349
    %v613 = vunpack.c.l.b16 %v350
    %v614 = vunpack.c.l.b16 %v351
    %v615 = vunpack.c.l.b16 %v352
    %v616 = vunpack.c.l.b16 %v353
    %v617 = vunpack.c.l.b16 %v354
    %v618 = vunpack.c.l.b16 %v355
    %v619 = vunpack.c.l.b16 %v356
    %v620 = vunpack.c.l.b16 %v357
    %v621 = vunpack.c.l.b16 %v358
    %v622 = vunpack.c.l.b16 %v359
    %v623 = vunpack.c.l.b16 %v360
    %v624 = vunpack.c.l.b16 %v361
    %v625 = vunpack.c.l.b16 %v362
    %v626 = vunpack.c.l.b16 %v363
    %v627 = vunpack.c.l.b16 %v364
    %v628 = vunpack.c.l.b16 %v365
    %v629 = vunpack.c.l.b16 %v366
    %v630 = vunpack.c.l.b16 %v367
    %v631 = vunpack.c.l.b16 %v368
    %v632 = vunpack.c.l.b16 %v369
    %v633 = vunpack.c.l.b16 %v370
    %v634 = vunpack.c.l.b16 %v371
    %v635 = vunpack.c.l.b16 %v372
    %v636 = vunpack.c.l.b16 %v373
    %v637 = vunpack.c.l.b16 %v374
    %v638 = vunpack.c.l.b16 %v375
    %v639 = vunpack.c.l.b16 %v376
    %v640 = vpack.c.b16 %v513, %v512
    %v641 = vpack.c.b16 %v515, %v514
    %v642 = vpack.c.b16 %v517, %v516
    %v643 = vpack.c.b16 %v519, %v518
    %v644 = vpack.c.b16 %v521, %v520
    %v645 = vpack.c.b16 %v523, %v522
    %v646 = vpack.c.b16 %v525, %v524
    %v647 = vpack.c.b16 %v527, %v526
    %v648 = vpack.c.b16 %v529, %v528
    %v649 = vpack.c.b16 %v531, %v530
    %v650 = vpack.c.b16 %v533, %v532
    %v651 = vpack.c.b16 %v535, %v534
    %v652 = vpack.c.b16 %v537, %v536
    %v653 = vpack.c.b16 %v539, %v538
    %v654 = vpack.c.b16 %v541, %v540
    %v655 = vpack.c.b16 %v543, %v542
    %v656 = vpack.c.b16 %v545, %v544
    %v657 = vpack.c.b16 %v547, %v546
    %v658 = vpack.c.b16 %v549, %v548
    %v659 = vpack.c.b16 %v551, %v550
    %v660 = vpack.c.b16 %v553, %v552
    %v661 = vpack.c.b16 %v555, %v554
    %v662 = vpack.c.b16 %v557, %v556
    %v663 = vpack.c.b16 %v559, %v558
    %v664 = vpack.c.b16 %v561, %v560
    %v665 = vpack.c.b16 %v563, %v562
    %v666 = vpack.c.b16 %v565, %v564
    %v667 = vpack.c.b16 %v567, %v566
    %v668 = vpack.c.b16 %v569, %v568
    %v669 = vpack.c.b16 %v571, %v570
    %v670 = vpack.c.b16 %v573, %v572
    %v671 = vpack.c.b16 %v575, %v574
    %v672 = vpack.c.b16 %v577, %v576
    %v673 = vpack.c.b16 %v579, %v578
    %v674 = vpack.c.b16 %v581, %v580
    %v675 = vpack.c.b16 %v583, %v582
    %v676 = vpack.c.b16 %v585, %v584
    %v677 = vpack.c.b16 %v587, %v586
    %v678 = vpack.c.b16 %v589, %v588
    %v679 = vpack.c.b16 %v591, %v590
    %v680 = vpack.c.b16 %v593, %v592
    %v681 = vpack.c.b16 %v595, %v594
    %v682 = vpack.c.b16 %v597, %v596
    %v683 = vpack.c.b16 %v599, %v598
    %v684 = vpack.c.b16 %v601, %v600
    %v685 = vpack.c.b16 %v603, %v602
    %v686 = vpack.c.b16 %v605, %v604
    %v687 = vpack.c.b16 %v607, %v606
    %v688 = vpack.c.b16 %v609, %v608
    %v689 = vpack.c.b16 %v611, %v610
    %v690 = vpack.c.b16 %v613, %v612
    %v691 = vpack.c.b16 %v615, %v614
    %v692 = vpack.c.b16 %v617, %v616
    %v693 = vpack.c.b16 %v619, %v618
    %v694 = vpack.c.b16 %v621, %v620
    %v695 = vpack.c.b16 %v623, %v622
    %v696 = vpack.c.b16 %v625, %v624
    %v697 = vpack.c.b16 %v627, %v626
    %v698 = vpack.c.b16 %v629, %v628
    %v699 = vpack.c.b16 %v631, %v630
    %v700 = vpack.c.b16 %v633, %v632
    %v701 = vpack.c.b16 %v635, %v634
    %v702 = vpack.c.b16 %v637, %v636
    %v703 = vpack.c.b16 %v639, %v638
    %768 = vmatprep.subr.bf16.mxu0 0
    %769 = vmatpush1.bf16.msra.mxu0 %v640
    %770 = vmatprep.subr.bf16.mxu0 0
    %771 = vmatpush1.bf16.msra.mxu0 %v641
    %772 = vmatprep.subr.bf16.mxu0 0
    %773 = vmatpush1.bf16.msra.mxu0 %v642
    %774 = vmatprep.subr.bf16.mxu0 0
    %775 = vmatpush1.bf16.msra.mxu0 %v643
    %776 = vmatprep.subr.bf16.mxu0 0
    %777 = vmatpush1.bf16.msra.mxu0 %v644
    %778 = vmatprep.subr.bf16.mxu0 0
    %779 = vmatpush1.bf16.msra.mxu0 %v645
    %780 = vmatprep.subr.bf16.mxu0 0
    %781 = vmatpush1.bf16.msra.mxu0 %v646
    %782 = vmatprep.subr.bf16.mxu0 0
    %783 = vmatpush1.bf16.msra.mxu0 %v647
    %784 = vmatprep.subr.bf16.mxu0 0
    %785 = vmatpush1.bf16.msra.mxu0 %v648
    %786 = vmatprep.subr.bf16.mxu0 0
    %787 = vmatpush1.bf16.msra.mxu0 %v649
    %788 = vmatprep.subr.bf16.mxu0 0
    %789 = vmatpush1.bf16.msra.mxu0 %v650
    %790 = vmatprep.subr.bf16.mxu0 0
    %791 = vmatpush1.bf16.msra.mxu0 %v651
    %792 = vmatprep.subr.bf16.mxu0 0
    %793 = vmatpush1.bf16.msra.mxu0 %v652
    %794 = vmatprep.subr.bf16.mxu0 0
    %795 = vmatpush1.bf16.msra.mxu0 %v653
    %796 = vmatprep.subr.bf16.mxu0 0
    %797 = vmatpush1.bf16.msra.mxu0 %v654
    %798 = vmatprep.subr.bf16.mxu0 0
    %799 = vmatpush1.bf16.msra.mxu0 %v655
    %800 = vmatprep.mubr.bf16.mxu0 %v242
    %801 = vmatmul.mubr.bf16.gmra.mrb[0].mxu0 %v241
    %v802 = vpop.f32.mrb[0].mxu0
    %v803 = vadd.f32 %v382, %v802
    %v804 = vpop.f32.mrb[0].mxu0
    %v805 = vpop.f32.mrb[0].mxu0
    %v806 = vadd.f32 %v382, %v805
    %v807 = vpop.f32.mrb[0].mxu0
    %808 = vdwg.mxu0
    %809 = vmatprep.subr.bf16.mxu0 0
    %810 = vmatpush1.bf16.msra.mxu0 %v656
    %811 = vmatprep.subr.bf16.mxu0 0
    %812 = vmatpush1.bf16.msra.mxu0 %v657
    %813 = vmatprep.subr.bf16.mxu0 0
    %814 = vmatpush1.bf16.msra.mxu0 %v658
    %815 = vmatprep.subr.bf16.mxu0 0
    %816 = vmatpush1.bf16.msra.mxu0 %v659
    %817 = vmatprep.subr.bf16.mxu0 0
    %818 = vmatpush1.bf16.msra.mxu0 %v660
    %819 = vmatprep.subr.bf16.mxu0 0
    %820 = vmatpush1.bf16.msra.mxu0 %v661
    %821 = vmatprep.subr.bf16.mxu0 0
    %822 = vmatpush1.bf16.msra.mxu0 %v662
    %823 = vmatprep.subr.bf16.mxu0 0
    %824 = vmatpush1.bf16.msra.mxu0 %v663
    %825 = vmatprep.subr.bf16.mxu0 0
    %826 = vmatpush1.bf16.msra.mxu0 %v664
    %827 = vmatprep.subr.bf16.mxu0 0
    %828 = vmatpush1.bf16.msra.mxu0 %v665
    %829 = vmatprep.subr.bf16.mxu0 0
    %830 = vmatpush1.bf16.msra.mxu0 %v666
    %831 = vmatprep.subr.bf16.mxu0 0
    %832 = vmatpush1.bf16.msra.mxu0 %v667
    %833 = vmatprep.subr.bf16.mxu0 0
    %834 = vmatpush1.bf16.msra.mxu0 %v668
    %835 = vmatprep.subr.bf16.mxu0 0
    %836 = vmatpush1.bf16.msra.mxu0 %v669
    %837 = vmatprep.subr.bf16.mxu0 0
    %838 = vmatpush1.bf16.msra.mxu0 %v670
    %839 = vmatprep.subr.bf16.mxu0 0
    %840 = vmatpush1.bf16.msra.mxu0 %v671
    %841 = vmatprep.mubr.bf16.mxu0 %v244
    %842 = vmatmul.mubr.bf16.gmra.mrb[0].mxu0 %v243
    %v843 = vpop.f32.mrb[0].mxu0
    %v844 = vadd.f32 %v803, %v843
    %v845 = vpop.f32.mrb[0].mxu0
    %v846 = vpop.f32.mrb[0].mxu0
    %v847 = vadd.f32 %v806, %v846
    %v848 = vpop.f32.mrb[0].mxu0
    %849 = vdwg.mxu0
    %850 = vmatprep.subr.bf16.mxu0 0
    %851 = vmatpush1.bf16.msra.mxu0 %v672
    %852 = vmatprep.subr.bf16.mxu0 0
    %853 = vmatpush1.bf16.msra.mxu0 %v673
    %854 = vmatprep.subr.bf16.mxu0 0
    %855 = vmatpush1.bf16.msra.mxu0 %v674
    %856 = vmatprep.subr.bf16.mxu0 0
    %857 = vmatpush1.bf16.msra.mxu0 %v675
    %858 = vmatprep.subr.bf16.mxu0 0
    %859 = vmatpush1.bf16.msra.mxu0 %v676
    %860 = vmatprep.subr.bf16.mxu0 0
    %861 = vmatpush1.bf16.msra.mxu0 %v677
    %862 = vmatprep.subr.bf16.mxu0 0
    %863 = vmatpush1.bf16.msra.mxu0 %v678
    %864 = vmatprep.subr.bf16.mxu0 0
    %865 = vmatpush1.bf16.msra.mxu0 %v679
    %866 = vmatprep.subr.bf16.mxu0 0
    %867 = vmatpush1.bf16.msra.mxu0 %v680
    %868 = vmatprep.subr.bf16.mxu0 0
    %869 = vmatpush1.bf16.msra.mxu0 %v681
    %870 = vmatprep.subr.bf16.mxu0 0
    %871 = vmatpush1.bf16.msra.mxu0 %v682
    %872 = vmatprep.subr.bf16.mxu0 0
    %873 = vmatpush1.bf16.msra.mxu0 %v683
    %874 = vmatprep.subr.bf16.mxu0 0
    %875 = vmatpush1.bf16.msra.mxu0 %v684
    %876 = vmatprep.subr.bf16.mxu0 0
    %877 = vmatpush1.bf16.msra.mxu0 %v685
    %878 = vmatprep.subr.bf16.mxu0 0
    %879 = vmatpush1.bf16.msra.mxu0 %v686
    %880 = vmatprep.subr.bf16.mxu0 0
    %881 = vmatpush1.bf16.msra.mxu0 %v687
    %882 = vmatprep.mubr.bf16.mxu0 %v246
    %883 = vmatmul.mubr.bf16.gmra.mrb[0].mxu0 %v245
    %v884 = vpop.f32.mrb[0].mxu0
    %v885 = vadd.f32 %v844, %v884
    %v886 = vpop.f32.mrb[0].mxu0
    %v887 = vpop.f32.mrb[0].mxu0
    %v888 = vadd.f32 %v847, %v887
    %v889 = vpop.f32.mrb[0].mxu0
    %890 = vdwg.mxu0
    %891 = vmatprep.subr.bf16.mxu0 0
    %892 = vmatpush1.bf16.msra.mxu0 %v688
    %893 = vmatprep.subr.bf16.mxu0 0
    %894 = vmatpush1.bf16.msra.mxu0 %v689
    %895 = vmatprep.subr.bf16.mxu0 0
    %896 = vmatpush1.bf16.msra.mxu0 %v690
    %897 = vmatprep.subr.bf16.mxu0 0
    %898 = vmatpush1.bf16.msra.mxu0 %v691
    %899 = vmatprep.subr.bf16.mxu0 0
    %900 = vmatpush1.bf16.msra.mxu0 %v692
    %901 = vmatprep.subr.bf16.mxu0 0
    %902 = vmatpush1.bf16.msra.mxu0 %v693
    %903 = vmatprep.subr.bf16.mxu0 0
    %904 = vmatpush1.bf16.msra.mxu0 %v694
    %905 = vmatprep.subr.bf16.mxu0 0
    %906 = vmatpush1.bf16.msra.mxu0 %v695
    %907 = vmatprep.subr.bf16.mxu0 0
    %908 = vmatpush1.bf16.msra.mxu0 %v696
    %909 = vmatprep.subr.bf16.mxu0 0
    %910 = vmatpush1.bf16.msra.mxu0 %v697
    %911 = vmatprep.subr.bf16.mxu0 0
    %912 = vmatpush1.bf16.msra.mxu0 %v698
    %913 = vmatprep.subr.bf16.mxu0 0
    %914 = vmatpush1.bf16.msra.mxu0 %v699
    %915 = vmatprep.subr.bf16.mxu0 0
    %916 = vmatpush1.bf16.msra.mxu0 %v700
    %917 = vmatprep.subr.bf16.mxu0 0
    %918 = vmatpush1.bf16.msra.mxu0 %v701
    %919 = vmatprep.subr.bf16.mxu0 0
    %920 = vmatpush1.bf16.msra.mxu0 %v702
    %921 = vmatprep.subr.bf16.mxu0 0
    %922 = vmatpush1.bf16.msra.mxu0 %v703
    %923 = vmatprep.mubr.bf16.mxu0 %v248
    %924 = vmatmul.mubr.bf16.gmra.mrb[0].mxu0 %v247
    %v925 = vpop.f32.mrb[0].mxu0
    %v926 = vadd.f32 %v885, %v925
    %v927 = vpop.f32.mrb[0].mxu0
    %v928 = vpop.f32.mrb[0].mxu0
    %v929 = vadd.f32 %v888, %v928
    %v930 = vpop.f32.mrb[0].mxu0
    %931 = vdwg.mxu0
    %v932 = vmax.f32 %v926, 0.0
    %v933 = vmax.f32 %v929, 0.0
    %v934 = vpack.c.bf16 %v933, %v932
    %v935 = vld [vmem:[#allocation4] sm:$0xff]
    %v936 = vld [vmem:[#allocation4 + $0x8] sm:$0xff]
    %v937 = vld [vmem:[#allocation4 + $0x10] sm:$0xff]
    %v938 = vld [vmem:[#allocation4 + $0x18] sm:$0xff]
    %v939 = vld [vmem:[#allocation4 + $0x20] sm:$0xff]
    %v940 = vld [vmem:[#allocation4 + $0x28] sm:$0xff]
    %v941 = vld [vmem:[#allocation4 + $0x30] sm:$0xff]
    %v942 = vld [vmem:[#allocation4 + $0x38] sm:$0xff]
    %v943 = vld [vmem:[#allocation4 + $0x40] sm:$0xff]
    %v944 = vld [vmem:[#allocation4 + $0x48] sm:$0xff]
    %v945 = vld [vmem:[#allocation4 + $0x50] sm:$0xff]
    %v946 = vld [vmem:[#allocation4 + $0x58] sm:$0xff]
    %v947 = vld [vmem:[#allocation4 + $0x60] sm:$0xff]
    %v948 = vld [vmem:[#allocation4 + $0x68] sm:$0xff]
    %v949 = vld [vmem:[#allocation4 + $0x70] sm:$0xff]
    %v950 = vld [vmem:[#allocation4 + $0x78] sm:$0xff]
    %v951 = vld [vmem:[#allocation4 + $0x80] sm:$0xff]
    %v952 = vld [vmem:[#allocation4 + $0x88] sm:$0xff]
    %v953 = vld [vmem:[#allocation4 + $0x90] sm:$0xff]
    %v954 = vld [vmem:[#allocation4 + $0x98] sm:$0xff]
    %v955 = vld [vmem:[#allocation4 + $0xa0] sm:$0xff]
    %v956 = vld [vmem:[#allocation4 + $0xa8] sm:$0xff]
    %v957 = vld [vmem:[#allocation4 + $0xb0] sm:$0xff]
    %v958 = vld [vmem:[#allocation4 + $0xb8] sm:$0xff]
    %v959 = vld [vmem:[#allocation4 + $0xc0] sm:$0xff]
    %v960 = vld [vmem:[#allocation4 + $0xc8] sm:$0xff]
    %v961 = vld [vmem:[#allocation4 + $0xd0] sm:$0xff]
    %v962 = vld [vmem:[#allocation4 + $0xd8] sm:$0xff]
    %v963 = vld [vmem:[#allocation4 + $0xe0] sm:$0xff]
    %v964 = vld [vmem:[#allocation4 + $0xe8] sm:$0xff]
    %v965 = vld [vmem:[#allocation4 + $0xf0] sm:$0xff]
    %v966 = vld [vmem:[#allocation4 + $0xf8] sm:$0xff]
    %v967 = vld [vmem:[#allocation4 + $0x100] sm:$0xff]
    %v968 = vld [vmem:[#allocation4 + $0x108] sm:$0xff]
    %v969 = vld [vmem:[#allocation4 + $0x110] sm:$0xff]
    %v970 = vld [vmem:[#allocation4 + $0x118] sm:$0xff]
    %v971 = vld [vmem:[#allocation4 + $0x120] sm:$0xff]
    %v972 = vld [vmem:[#allocation4 + $0x128] sm:$0xff]
    %v973 = vld [vmem:[#allocation4 + $0x130] sm:$0xff]
    %v974 = vld [vmem:[#allocation4 + $0x138] sm:$0xff]
    %v975 = vld [vmem:[#allocation4 + $0x140] sm:$0xff]
    %v976 = vld [vmem:[#allocation4 + $0x148] sm:$0xff]
    %v977 = vld [vmem:[#allocation4 + $0x150] sm:$0xff]
    %v978 = vld [vmem:[#allocation4 + $0x158] sm:$0xff]
    %v979 = vld [vmem:[#allocation4 + $0x160] sm:$0xff]
    %v980 = vld [vmem:[#allocation4 + $0x168] sm:$0xff]
    %v981 = vld [vmem:[#allocation4 + $0x170] sm:$0xff]
    %v982 = vld [vmem:[#allocation4 + $0x178] sm:$0xff]
    %v983 = vld [vmem:[#allocation4 + $0x180] sm:$0xff]
    %v984 = vld [vmem:[#allocation4 + $0x188] sm:$0xff]
    %v985 = vld [vmem:[#allocation4 + $0x190] sm:$0xff]
    %v986 = vld [vmem:[#allocation4 + $0x198] sm:$0xff]
    %v987 = vld [vmem:[#allocation4 + $0x1a0] sm:$0xff]
    %v988 = vld [vmem:[#allocation4 + $0x1a8] sm:$0xff]
    %v989 = vld [vmem:[#allocation4 + $0x1b0] sm:$0xff]
    %v990 = vld [vmem:[#allocation4 + $0x1b8] sm:$0xff]
    %v991 = vld [vmem:[#allocation4 + $0x1c0] sm:$0xff]
    %v992 = vld [vmem:[#allocation4 + $0x1c8] sm:$0xff]
    %v993 = vld [vmem:[#allocation4 + $0x1d0] sm:$0xff]
    %v994 = vld [vmem:[#allocation4 + $0x1d8] sm:$0xff]
    %v995 = vld [vmem:[#allocation4 + $0x1e0] sm:$0xff]
    %v996 = vld [vmem:[#allocation4 + $0x1e8] sm:$0xff]
    %v997 = vld [vmem:[#allocation4 + $0x1f0] sm:$0xff]
    %v998 = vld [vmem:[#allocation4 + $0x1f8] sm:$0xff]
    %v999 = vld [vmem:[%s4] sm:$0xff]
    %v1001 = vlaneseq
    %v1002 = vshrl.u32 %v1001, 7
    %v1003 = vsub.s32 0, %v1002
    %v1004 = vrot.slane %v999, %v1003
    %v1005 = vlaneseq
    %v1006 = vshrl.u32 %v1005, 7
    %v1007 = vsub.s32 1, %v1006
    %v1008 = vrot.slane %v999, %v1007
    %v1009 = vlaneseq
    %v1010 = vshrl.u32 %v1009, 7
    %v1011 = vsub.s32 2, %v1010
    %v1012 = vrot.slane %v999, %v1011
    %v1013 = vlaneseq
    %v1014 = vshrl.u32 %v1013, 7
    %v1015 = vsub.s32 3, %v1014
    %v1016 = vrot.slane %v999, %v1015
    %v1017 = vlaneseq
    %v1018 = vshrl.u32 %v1017, 7
    %v1019 = vsub.s32 4, %v1018
    %v1020 = vrot.slane %v999, %v1019
    %v1021 = vlaneseq
    %v1022 = vshrl.u32 %v1021, 7
    %v1023 = vsub.s32 5, %v1022
    %v1024 = vrot.slane %v999, %v1023
    %v1025 = vlaneseq
    %v1026 = vshrl.u32 %v1025, 7
    %v1027 = vsub.s32 6, %v1026
    %v1028 = vrot.slane %v999, %v1027
    %v1029 = vlaneseq
    %v1030 = vshrl.u32 %v1029, 7
    %v1031 = vsub.s32 7, %v1030
    %v1032 = vrot.slane %v999, %v1031
    %v1105 = vunpack.c.l.b16 %v935
    %v1106 = vunpack.c.h.b16 %v935
    %v1107 = vunpack.c.l.b16 %v936
    %v1108 = vunpack.c.h.b16 %v936
    %v1109 = vunpack.c.l.b16 %v937
    %v1110 = vunpack.c.h.b16 %v937
    %v1111 = vunpack.c.l.b16 %v938
    %v1112 = vunpack.c.h.b16 %v938
    %v1113 = vunpack.c.l.b16 %v939
    %v1114 = vunpack.c.h.b16 %v939
    %v1115 = vunpack.c.l.b16 %v940
    %v1116 = vunpack.c.h.b16 %v940
    %v1117 = vunpack.c.l.b16 %v941
    %v1118 = vunpack.c.h.b16 %v941
    %v1119 = vunpack.c.l.b16 %v942
    %v1120 = vunpack.c.h.b16 %v942
    %v1121 = vunpack.c.l.b16 %v943
    %v1122 = vunpack.c.h.b16 %v943
    %v1123 = vunpack.c.l.b16 %v944
    %v1124 = vunpack.c.h.b16 %v944
    %v1125 = vunpack.c.l.b16 %v945
    %v1126 = vunpack.c.h.b16 %v945
    %v1127 = vunpack.c.l.b16 %v946
    %v1128 = vunpack.c.h.b16 %v946
    %v1129 = vunpack.c.l.b16 %v947
    %v1130 = vunpack.c.h.b16 %v947
    %v1131 = vunpack.c.l.b16 %v948
    %v1132 = vunpack.c.h.b16 %v948
    %v1133 = vunpack.c.l.b16 %v949
    %v1134 = vunpack.c.h.b16 %v949
    %v1135 = vunpack.c.l.b16 %v950
    %v1136 = vunpack.c.h.b16 %v950
    %v1137 = vunpack.c.l.b16 %v951
    %v1138 = vunpack.c.h.b16 %v951
    %v1139 = vunpack.c.l.b16 %v952
    %v1140 = vunpack.c.h.b16 %v952
    %v1141 = vunpack.c.l.b16 %v953
    %v1142 = vunpack.c.h.b16 %v953
    %v1143 = vunpack.c.l.b16 %v954
    %v1144 = vunpack.c.h.b16 %v954
    %v1145 = vunpack.c.l.b16 %v955
    %v1146 = vunpack.c.h.b16 %v955
    %v1147 = vunpack.c.l.b16 %v956
    %v1148 = vunpack.c.h.b16 %v956
    %v1149 = vunpack.c.l.b16 %v957
    %v1150 = vunpack.c.h.b16 %v957
    %v1151 = vunpack.c.l.b16 %v958
    %v1152 = vunpack.c.h.b16 %v958
    %v1153 = vunpack.c.l.b16 %v959
    %v1154 = vunpack.c.h.b16 %v959
    %v1155 = vunpack.c.l.b16 %v960
    %v1156 = vunpack.c.h.b16 %v960
    %v1157 = vunpack.c.l.b16 %v961
    %v1158 = vunpack.c.h.b16 %v961
    %v1159 = vunpack.c.l.b16 %v962
    %v1160 = vunpack.c.h.b16 %v962
    %v1161 = vunpack.c.l.b16 %v963
    %v1162 = vunpack.c.h.b16 %v963
    %v1163 = vunpack.c.l.b16 %v964
    %v1164 = vunpack.c.h.b16 %v964
    %v1165 = vunpack.c.l.b16 %v965
    %v1166 = vunpack.c.h.b16 %v965
    %v1167 = vunpack.c.l.b16 %v966
    %v1168 = vunpack.c.h.b16 %v966
    %v1169 = vunpack.c.l.b16 %v967
    %v1170 = vunpack.c.h.b16 %v967
    %v1171 = vunpack.c.l.b16 %v968
    %v1172 = vunpack.c.h.b16 %v968
    %v1173 = vunpack.c.l.b16 %v969
    %v1174 = vunpack.c.h.b16 %v969
    %v1175 = vunpack.c.l.b16 %v970
    %v1176 = vunpack.c.h.b16 %v970
    %v1177 = vunpack.c.l.b16 %v971
    %v1178 = vunpack.c.h.b16 %v971
    %v1179 = vunpack.c.l.b16 %v972
    %v1180 = vunpack.c.h.b16 %v972
    %v1181 = vunpack.c.l.b16 %v973
    %v1182 = vunpack.c.h.b16 %v973
    %v1183 = vunpack.c.l.b16 %v974
    %v1184 = vunpack.c.h.b16 %v974
    %v1185 = vunpack.c.l.b16 %v975
    %v1186 = vunpack.c.h.b16 %v975
    %v1187 = vunpack.c.l.b16 %v976
    %v1188 = vunpack.c.h.b16 %v976
    %v1189 = vunpack.c.l.b16 %v977
    %v1190 = vunpack.c.h.b16 %v977
    %v1191 = vunpack.c.l.b16 %v978
    %v1192 = vunpack.c.h.b16 %v978
    %v1193 = vunpack.c.l.b16 %v979
    %v1194 = vunpack.c.h.b16 %v979
    %v1195 = vunpack.c.l.b16 %v980
    %v1196 = vunpack.c.h.b16 %v980
    %v1197 = vunpack.c.l.b16 %v981
    %v1198 = vunpack.c.h.b16 %v981
    %v1199 = vunpack.c.l.b16 %v982
    %v1200 = vunpack.c.h.b16 %v982
    %v1201 = vunpack.c.l.b16 %v983
    %v1202 = vunpack.c.h.b16 %v983
    %v1203 = vunpack.c.l.b16 %v984
    %v1204 = vunpack.c.h.b16 %v984
    %v1205 = vunpack.c.l.b16 %v985
    %v1206 = vunpack.c.h.b16 %v985
    %v1207 = vunpack.c.l.b16 %v986
    %v1208 = vunpack.c.h.b16 %v986
    %v1209 = vunpack.c.l.b16 %v987
    %v1210 = vunpack.c.h.b16 %v987
    %v1211 = vunpack.c.l.b16 %v988
    %v1212 = vunpack.c.h.b16 %v988
    %v1213 = vunpack.c.l.b16 %v989
    %v1214 = vunpack.c.h.b16 %v989
    %v1215 = vunpack.c.l.b16 %v990
    %v1216 = vunpack.c.h.b16 %v990
    %v1217 = vunpack.c.l.b16 %v991
    %v1218 = vunpack.c.h.b16 %v991
    %v1219 = vunpack.c.l.b16 %v992
    %v1220 = vunpack.c.h.b16 %v992
    %v1221 = vunpack.c.l.b16 %v993
    %v1222 = vunpack.c.h.b16 %v993
    %v1223 = vunpack.c.l.b16 %v994
    %v1224 = vunpack.c.h.b16 %v994
    %v1225 = vunpack.c.l.b16 %v995
    %v1226 = vunpack.c.h.b16 %v995
    %v1227 = vunpack.c.l.b16 %v996
    %v1228 = vunpack.c.h.b16 %v996
    %v1229 = vunpack.c.l.b16 %v997
    %v1230 = vunpack.c.h.b16 %v997
    %v1231 = vunpack.c.l.b16 %v998
    %v1232 = vunpack.c.h.b16 %v998
    %v1233 = vpack.c.b16 %v1113, %v1105
    %v1234 = vpack.c.b16 %v1114, %v1106
    %v1235 = vpack.c.b16 %v1115, %v1107
    %v1236 = vpack.c.b16 %v1116, %v1108
    %v1237 = vpack.c.b16 %v1117, %v1109
    %v1238 = vpack.c.b16 %v1118, %v1110
    %v1239 = vpack.c.b16 %v1119, %v1111
    %v1240 = vpack.c.b16 %v1120, %v1112
    %v1241 = vpack.c.b16 %v1129, %v1121
    %v1242 = vpack.c.b16 %v1130, %v1122
    %v1243 = vpack.c.b16 %v1131, %v1123
    %v1244 = vpack.c.b16 %v1132, %v1124
    %v1245 = vpack.c.b16 %v1133, %v1125
    %v1246 = vpack.c.b16 %v1134, %v1126
    %v1247 = vpack.c.b16 %v1135, %v1127
    %v1248 = vpack.c.b16 %v1136, %v1128
    %v1249 = vpack.c.b16 %v1145, %v1137
    %v1250 = vpack.c.b16 %v1146, %v1138
    %v1251 = vpack.c.b16 %v1147, %v1139
    %v1252 = vpack.c.b16 %v1148, %v1140
    %v1253 = vpack.c.b16 %v1149, %v1141
    %v1254 = vpack.c.b16 %v1150, %v1142
    %v1255 = vpack.c.b16 %v1151, %v1143
    %v1256 = vpack.c.b16 %v1152, %v1144
    %v1257 = vpack.c.b16 %v1161, %v1153
    %v1258 = vpack.c.b16 %v1162, %v1154
    %v1259 = vpack.c.b16 %v1163, %v1155
    %v1260 = vpack.c.b16 %v1164, %v1156
    %v1261 = vpack.c.b16 %v1165, %v1157
    %v1262 = vpack.c.b16 %v1166, %v1158
    %v1263 = vpack.c.b16 %v1167, %v1159
    %v1264 = vpack.c.b16 %v1168, %v1160
    %v1265 = vpack.c.b16 %v1177, %v1169
    %v1266 = vpack.c.b16 %v1178, %v1170
    %v1267 = vpack.c.b16 %v1179, %v1171
    %v1268 = vpack.c.b16 %v1180, %v1172
    %v1269 = vpack.c.b16 %v1181, %v1173
    %v1270 = vpack.c.b16 %v1182, %v1174
    %v1271 = vpack.c.b16 %v1183, %v1175
    %v1272 = vpack.c.b16 %v1184, %v1176
    %v1273 = vpack.c.b16 %v1193, %v1185
    %v1274 = vpack.c.b16 %v1194, %v1186
    %v1275 = vpack.c.b16 %v1195, %v1187
    %v1276 = vpack.c.b16 %v1196, %v1188
    %v1277 = vpack.c.b16 %v1197, %v1189
    %v1278 = vpack.c.b16 %v1198, %v1190
    %v1279 = vpack.c.b16 %v1199, %v1191
    %v1280 = vpack.c.b16 %v1200, %v1192
    %v1281 = vpack.c.b16 %v1209, %v1201
    %v1282 = vpack.c.b16 %v1210, %v1202
    %v1283 = vpack.c.b16 %v1211, %v1203
    %v1284 = vpack.c.b16 %v1212, %v1204
    %v1285 = vpack.c.b16 %v1213, %v1205
    %v1286 = vpack.c.b16 %v1214, %v1206
    %v1287 = vpack.c.b16 %v1215, %v1207
    %v1288 = vpack.c.b16 %v1216, %v1208
    %v1289 = vpack.c.b16 %v1225, %v1217
    %v1290 = vpack.c.b16 %v1226, %v1218
    %v1291 = vpack.c.b16 %v1227, %v1219
    %v1292 = vpack.c.b16 %v1228, %v1220
    %v1293 = vpack.c.b16 %v1229, %v1221
    %v1294 = vpack.c.b16 %v1230, %v1222
    %v1295 = vpack.c.b16 %v1231, %v1223
    %v1296 = vpack.c.b16 %v1232, %v1224
    %1361 = vmatprep.subr.bf16.mxu0 %v1234
    %1362 = vmatpush1.bf16.msra.mxu0 %v1233
    %1363 = vmatprep.subr.bf16.mxu0 %v1242
    %1364 = vmatpush1.bf16.msra.mxu0 %v1241
    %1365 = vmatprep.subr.bf16.mxu0 %v1250
    %1366 = vmatpush1.bf16.msra.mxu0 %v1249
    %1367 = vmatprep.subr.bf16.mxu0 %v1258
    %1368 = vmatpush1.bf16.msra.mxu0 %v1257
    %1369 = vmatprep.subr.bf16.mxu0 %v1266
    %1370 = vmatpush1.bf16.msra.mxu0 %v1265
    %1371 = vmatprep.subr.bf16.mxu0 %v1274
    %1372 = vmatpush1.bf16.msra.mxu0 %v1273
    %1373 = vmatprep.subr.bf16.mxu0 %v1282
    %1374 = vmatpush1.bf16.msra.mxu0 %v1281
    %1375 = vmatprep.subr.bf16.mxu0 %v1290
    %1376 = vmatpush1.bf16.msra.mxu0 %v1289
    %1377 = vmatprep.subr.bf16.mxu0 0
    %1378 = vmatpush1.bf16.msra.mxu0 0
    %1379 = vmatprep.subr.bf16.mxu0 0
    %1380 = vmatpush1.bf16.msra.mxu0 0
    %1381 = vmatprep.subr.bf16.mxu0 0
    %1382 = vmatpush1.bf16.msra.mxu0 0
    %1383 = vmatprep.subr.bf16.mxu0 0
    %1384 = vmatpush1.bf16.msra.mxu0 0
    %1385 = vmatprep.subr.bf16.mxu0 0
    %1386 = vmatpush1.bf16.msra.mxu0 0
    %1387 = vmatprep.subr.bf16.mxu0 0
    %1388 = vmatpush1.bf16.msra.mxu0 0
    %1389 = vmatprep.subr.bf16.mxu0 0
    %1390 = vmatpush1.bf16.msra.mxu0 0
    %1391 = vmatprep.subr.bf16.mxu0 0
    %1392 = vmatpush1.bf16.msra.mxu0 0
    %1393 = vmatprep.mubr.bf16.mxu0 0
    %1394 = vmatmul.mubr.bf16.gmra.mrb[0].mxu0 %v934
    %v1395 = vpop.f32.mrb[0].mxu0
    %v1396 = vadd.f32 %v1004, %v1395
    %v1397 = vpop.f32.mrb[0].mxu0
    %v1398 = vadd.f32 %v1008, %v1397
    %v1399 = vpop.f32.mrb[0].mxu0
    %v1400 = vadd.f32 %v1004, %v1399
    %v1401 = vpop.f32.mrb[0].mxu0
    %v1402 = vadd.f32 %v1008, %v1401
    %1403 = vdwg.mxu0
    %1404 = vmatprep.subr.bf16.mxu0 %v1236
    %1405 = vmatpush1.bf16.msra.mxu0 %v1235
    %1406 = vmatprep.subr.bf16.mxu0 %v1244
    %1407 = vmatpush1.bf16.msra.mxu0 %v1243
    %1408 = vmatprep.subr.bf16.mxu0 %v1252
    %1409 = vmatpush1.bf16.msra.mxu0 %v1251
    %1410 = vmatprep.subr.bf16.mxu0 %v1260
    %1411 = vmatpush1.bf16.msra.mxu0 %v1259
    %1412 = vmatprep.subr.bf16.mxu0 %v1268
    %1413 = vmatpush1.bf16.msra.mxu0 %v1267
    %1414 = vmatprep.subr.bf16.mxu0 %v1276
    %1415 = vmatpush1.bf16.msra.mxu0 %v1275
    %1416 = vmatprep.subr.bf16.mxu0 %v1284
    %1417 = vmatpush1.bf16.msra.mxu0 %v1283
    %1418 = vmatprep.subr.bf16.mxu0 %v1292
    %1419 = vmatpush1.bf16.msra.mxu0 %v1291
    %1420 = vmatprep.subr.bf16.mxu0 0
    %1421 = vmatpush1.bf16.msra.mxu0 0
    %1422 = vmatprep.subr.bf16.mxu0 0
    %1423 = vmatpush1.bf16.msra.mxu0 0
    %1424 = vmatprep.subr.bf16.mxu0 0
    %1425 = vmatpush1.bf16.msra.mxu0 0
    %1426 = vmatprep.subr.bf16.mxu0 0
    %1427 = vmatpush1.bf16.msra.mxu0 0
    %1428 = vmatprep.subr.bf16.mxu0 0
    %1429 = vmatpush1.bf16.msra.mxu0 0
    %1430 = vmatprep.subr.bf16.mxu0 0
    %1431 = vmatpush1.bf16.msra.mxu0 0
    %1432 = vmatprep.subr.bf16.mxu0 0
    %1433 = vmatpush1.bf16.msra.mxu0 0
    %1434 = vmatprep.subr.bf16.mxu0 0
    %1435 = vmatpush1.bf16.msra.mxu0 0
    %1436 = vmatprep.mubr.bf16.mxu0 0
    %1437 = vmatmul.mubr.bf16.gmra.mrb[0].mxu0 %v934
    %v1438 = vpop.f32.mrb[0].mxu0
    %v1439 = vadd.f32 %v1012, %v1438
    %v1440 = vpop.f32.mrb[0].mxu0
    %v1441 = vadd.f32 %v1016, %v1440
    %v1442 = vpop.f32.mrb[0].mxu0
    %v1443 = vadd.f32 %v1012, %v1442
    %v1444 = vpop.f32.mrb[0].mxu0
    %v1445 = vadd.f32 %v1016, %v1444
    %1446 = vdwg.mxu0
    %1447 = vmatprep.subr.bf16.mxu0 %v1238
    %1448 = vmatpush1.bf16.msra.mxu0 %v1237
    %1449 = vmatprep.subr.bf16.mxu0 %v1246
    %1450 = vmatpush1.bf16.msra.mxu0 %v1245
    %1451 = vmatprep.subr.bf16.mxu0 %v1254
    %1452 = vmatpush1.bf16.msra.mxu0 %v1253
    %1453 = vmatprep.subr.bf16.mxu0 %v1262
    %1454 = vmatpush1.bf16.msra.mxu0 %v1261
    %1455 = vmatprep.subr.bf16.mxu0 %v1270
    %1456 = vmatpush1.bf16.msra.mxu0 %v1269
    %1457 = vmatprep.subr.bf16.mxu0 %v1278
    %1458 = vmatpush1.bf16.msra.mxu0 %v1277
    %1459 = vmatprep.subr.bf16.mxu0 %v1286
    %1460 = vmatpush1.bf16.msra.mxu0 %v1285
    %1461 = vmatprep.subr.bf16.mxu0 %v1294
    %1462 = vmatpush1.bf16.msra.mxu0 %v1293
    %1463 = vmatprep.subr.bf16.mxu0 0
    %1464 = vmatpush1.bf16.msra.mxu0 0
    %1465 = vmatprep.subr.bf16.mxu0 0
    %1466 = vmatpush1.bf16.msra.mxu0 0
    %1467 = vmatprep.subr.bf16.mxu0 0
    %1468 = vmatpush1.bf16.msra.mxu0 0
    %1469 = vmatprep.subr.bf16.mxu0 0
    %1470 = vmatpush1.bf16.msra.mxu0 0
    %1471 = vmatprep.subr.bf16.mxu0 0
    %1472 = vmatpush1.bf16.msra.mxu0 0
    %1473 = vmatprep.subr.bf16.mxu0 0
    %1474 = vmatpush1.bf16.msra.mxu0 0
    %1475 = vmatprep.subr.bf16.mxu0 0
    %1476 = vmatpush1.bf16.msra.mxu0 0
    %1477 = vmatprep.subr.bf16.mxu0 0
    %1478 = vmatpush1.bf16.msra.mxu0 0
    %1479 = vmatprep.mubr.bf16.mxu0 0
    %1480 = vmatmul.mubr.bf16.gmra.mrb[0].mxu0 %v934
    %v1481 = vpop.f32.mrb[0].mxu0
    %v1482 = vadd.f32 %v1020, %v1481
    %v1483 = vpop.f32.mrb[0].mxu0
    %v1484 = vadd.f32 %v1024, %v1483
    %v1485 = vpop.f32.mrb[0].mxu0
    %v1486 = vadd.f32 %v1020, %v1485
    %v1487 = vpop.f32.mrb[0].mxu0
    %v1488 = vadd.f32 %v1024, %v1487
    %1489 = vdwg.mxu0
    %1490 = vmatprep.subr.bf16.mxu0 %v1240
    %1491 = vmatpush1.bf16.msra.mxu0 %v1239
    %1492 = vmatprep.subr.bf16.mxu0 %v1248
    %1493 = vmatpush1.bf16.msra.mxu0 %v1247
    %1494 = vmatprep.subr.bf16.mxu0 %v1256
    %1495 = vmatpush1.bf16.msra.mxu0 %v1255
    %1496 = vmatprep.subr.bf16.mxu0 %v1264
    %1497 = vmatpush1.bf16.msra.mxu0 %v1263
    %1498 = vmatprep.subr.bf16.mxu0 %v1272
    %1499 = vmatpush1.bf16.msra.mxu0 %v1271
    %1500 = vmatprep.subr.bf16.mxu0 %v1280
    %1501 = vmatpush1.bf16.msra.mxu0 %v1279
    %1502 = vmatprep.subr.bf16.mxu0 %v1288
    %1503 = vmatpush1.bf16.msra.mxu0 %v1287
    %1504 = vmatprep.subr.bf16.mxu0 %v1296
    %1505 = vmatpush1.bf16.msra.mxu0 %v1295
    %1506 = vmatprep.subr.bf16.mxu0 0
    %1507 = vmatpush1.bf16.msra.mxu0 0
    %1508 = vmatprep.subr.bf16.mxu0 0
    %1509 = vmatpush1.bf16.msra.mxu0 0
    %1510 = vmatprep.subr.bf16.mxu0 0
    %1511 = vmatpush1.bf16.msra.mxu0 0
    %1512 = vmatprep.subr.bf16.mxu0 0
    %1513 = vmatpush1.bf16.msra.mxu0 0
    %1514 = vmatprep.subr.bf16.mxu0 0
    %1515 = vmatpush1.bf16.msra.mxu0 0
    %1516 = vmatprep.subr.bf16.mxu0 0
    %1517 = vmatpush1.bf16.msra.mxu0 0
    %1518 = vmatprep.subr.bf16.mxu0 0
    %1519 = vmatpush1.bf16.msra.mxu0 0
    %1520 = vmatprep.subr.bf16.mxu0 0
    %1521 = vmatpush1.bf16.msra.mxu0 0
    %1522 = vmatprep.mubr.bf16.mxu0 0
    %1523 = vmatmul.mubr.bf16.gmra.mrb[0].mxu0 %v934
    %v1524 = vpop.f32.mrb[0].mxu0
    %v1525 = vadd.f32 %v1028, %v1524
    %v1526 = vpop.f32.mrb[0].mxu0
    %v1527 = vadd.f32 %v1032, %v1526
    %v1528 = vpop.f32.mrb[0].mxu0
    %v1529 = vadd.f32 %v1028, %v1528
    %v1530 = vpop.f32.mrb[0].mxu0
    %v1531 = vadd.f32 %v1032, %v1530
    %1532 = vdwg.mxu0
    %v1533 = vsub.f32 0.0, %v1396
    %v1534 = vsub.f32 0.0, %v1398
    %v1535 = vsub.f32 0.0, %v1439
    %v1536 = vsub.f32 0.0, %v1441
    %v1537 = vsub.f32 0.0, %v1482
    %v1538 = vsub.f32 0.0, %v1484
    %v1539 = vsub.f32 0.0, %v1525
    %v1540 = vsub.f32 0.0, %v1527
    %v1541 = vsub.f32 0.0, %v1400
    %v1542 = vsub.f32 0.0, %v1402
    %v1543 = vsub.f32 0.0, %v1443
    %v1544 = vsub.f32 0.0, %v1445
    %v1545 = vsub.f32 0.0, %v1486
    %v1546 = vsub.f32 0.0, %v1488
    %v1547 = vsub.f32 0.0, %v1529
    %v1548 = vsub.f32 0.0, %v1531
    %v1549 = vmul.f32 %v1533, 1.442695
    %v1550 = vpow.pop %v1549
    %v1551 = vmul.f32 %v1534, 1.442695
    %v1552 = vpow.pop %v1551
    %v1553 = vmul.f32 %v1535, 1.442695
    %v1554 = vpow.pop %v1553
    %v1555 = vmul.f32 %v1536, 1.442695
    %v1556 = vpow.pop %v1555
    %v1557 = vmul.f32 %v1537, 1.442695
    %v1558 = vpow.pop %v1557
    %v1559 = vmul.f32 %v1538, 1.442695
    %v1560 = vpow.pop %v1559
    %v1561 = vmul.f32 %v1539, 1.442695
    %v1562 = vpow.pop %v1561
    %v1563 = vmul.f32 %v1540, 1.442695
    %v1564 = vpow.pop %v1563
    %v1565 = vmul.f32 %v1541, 1.442695
    %v1566 = vpow.pop %v1565
    %v1567 = vmul.f32 %v1542, 1.442695
    %v1568 = vpow.pop %v1567
    %v1569 = vmul.f32 %v1543, 1.442695
    %v1570 = vpow.pop %v1569
    %v1571 = vmul.f32 %v1544, 1.442695
    %v1572 = vpow.pop %v1571
    %v1573 = vmul.f32 %v1545, 1.442695
    %v1574 = vpow.pop %v1573
    %v1575 = vmul.f32 %v1546, 1.442695
    %v1576 = vpow.pop %v1575
    %v1577 = vmul.f32 %v1547, 1.442695
    %v1578 = vpow.pop %v1577
    %v1579 = vmul.f32 %v1548, 1.442695
    %v1580 = vpow.pop %v1579
    %v1581 = vadd.f32 %v1550, 1.0
    %v1582 = vadd.f32 %v1552, 1.0
    %v1583 = vadd.f32 %v1554, 1.0
    %v1584 = vadd.f32 %v1556, 1.0
    %v1585 = vadd.f32 %v1558, 1.0
    %v1586 = vadd.f32 %v1560, 1.0
    %v1587 = vadd.f32 %v1562, 1.0
    %v1588 = vadd.f32 %v1564, 1.0
    %v1589 = vadd.f32 %v1566, 1.0
    %v1590 = vadd.f32 %v1568, 1.0
    %v1591 = vadd.f32 %v1570, 1.0
    %v1592 = vadd.f32 %v1572, 1.0
    %v1593 = vadd.f32 %v1574, 1.0
    %v1594 = vadd.f32 %v1576, 1.0
    %v1595 = vadd.f32 %v1578, 1.0
    %v1596 = vadd.f32 %v1580, 1.0
    %v1597 = vrcp.pop %v1581
    %v1598 = vrcp.pop %v1582
    %v1599 = vrcp.pop %v1583
    %v1600 = vrcp.pop %v1584
    %v1601 = vrcp.pop %v1585
    %v1602 = vrcp.pop %v1586
    %v1603 = vrcp.pop %v1587
    %v1604 = vrcp.pop %v1588
    %v1605 = vrcp.pop %v1589
    %v1606 = vrcp.pop %v1590
    %v1607 = vrcp.pop %v1591
    %v1608 = vrcp.pop %v1592
    %v1609 = vrcp.pop %v1593
    %v1610 = vrcp.pop %v1594
    %v1611 = vrcp.pop %v1595
    %v1612 = vrcp.pop %v1596
    %v1613 = vpack.c.bf16 %v1605, %v1597
    %v1614 = vpack.c.bf16 %v1606, %v1598
    %v1615 = vpack.c.bf16 %v1607, %v1599
    %v1616 = vpack.c.bf16 %v1608, %v1600
    %v1617 = vpack.c.bf16 %v1609, %v1601
    %v1618 = vpack.c.bf16 %v1610, %v1602
    %v1619 = vpack.c.bf16 %v1611, %v1603
    %v1620 = vpack.c.bf16 %v1612, %v1604
    %v1629 = vcombine.low %v1613, %v1614
    %v1630 = vcombine.high %v1613, %v1614
    %v1631 = vcombine.low %v1615, %v1616
    %v1632 = vcombine.high %v1615, %v1616
    %v1633 = vcombine.low %v1617, %v1618
    %v1634 = vcombine.high %v1617, %v1618
    %v1635 = vcombine.low %v1619, %v1620
    %v1636 = vcombine.high %v1619, %v1620
    %v1638 = vunpack.c.l.s4 1966171168
    %v1639 = vunpack.c.0.s8 %v1638
    %v1640 = vlaneseq
    %v1641 = vshrl.u32 %v1640, 7
    %v1642 = vsub.s32 %v1639, %v1641
    %v1643 = vrot.slane %v1629, %v1642
    %v1645 = vunpack.c.l.s4 1966171168
    %v1646 = vunpack.c.0.s8 %v1645
    %v1647 = vlaneseq
    %v1648 = vshrl.u32 %v1647, 7
    %v1649 = vsub.s32 %v1646, %v1648
    %v1650 = vrot.slane %v1630, %v1649
    %v1652 = vunpack.c.l.s4 1966171168
    %v1653 = vunpack.c.0.s8 %v1652
    %v1654 = vlaneseq
    %v1655 = vshrl.u32 %v1654, 7
    %v1656 = vsub.s32 %v1653, %v1655
    %v1657 = vrot.slane %v1631, %v1656
    %v1659 = vunpack.c.l.s4 1966171168
    %v1660 = vunpack.c.0.s8 %v1659
    %v1661 = vlaneseq
    %v1662 = vshrl.u32 %v1661, 7
    %v1663 = vsub.s32 %v1660, %v1662
    %v1664 = vrot.slane %v1632, %v1663
    %v1666 = vunpack.c.l.s4 1966171168
    %v1667 = vunpack.c.0.s8 %v1666
    %v1668 = vlaneseq
    %v1669 = vshrl.u32 %v1668, 7
    %v1670 = vsub.s32 %v1667, %v1669
    %v1671 = vrot.slane %v1633, %v1670
    %v1673 = vunpack.c.l.s4 1966171168
    %v1674 = vunpack.c.0.s8 %v1673
    %v1675 = vlaneseq
    %v1676 = vshrl.u32 %v1675, 7
    %v1677 = vsub.s32 %v1674, %v1676
    %v1678 = vrot.slane %v1634, %v1677
    %v1680 = vunpack.c.l.s4 1966171168
    %v1681 = vunpack.c.0.s8 %v1680
    %v1682 = vlaneseq
    %v1683 = vshrl.u32 %v1682, 7
    %v1684 = vsub.s32 %v1681, %v1683
    %v1685 = vrot.slane %v1635, %v1684
    %v1687 = vunpack.c.l.s4 1966171168
    %v1688 = vunpack.c.0.s8 %v1687
    %v1689 = vlaneseq
    %v1690 = vshrl.u32 %v1689, 7
    %v1691 = vsub.s32 %v1688, %v1690
    %v1692 = vrot.slane %v1636, %v1691
    %v1693 = vcombine.low %v1643, %v1657
    %v1694 = vcombine.high %v1643, %v1657
    %v1695 = vcombine.low %v1650, %v1664
    %v1696 = vcombine.high %v1650, %v1664
    %v1697 = vcombine.low %v1671, %v1685
    %v1698 = vcombine.high %v1671, %v1685
    %v1699 = vcombine.low %v1678, %v1692
    %v1700 = vcombine.high %v1678, %v1692
    %v1702 = vunpack.c.l.s4 1966171168
    %v1703 = vunpack.c.0.s8 %v1702
    %v1704 = vlaneseq
    %v1705 = vshrl.u32 %v1704, 7
    %v1706 = vsub.s32 %v1703, %v1705
    %v1707 = vrot.slane %v1693, %v1706
    %v1709 = vunpack.c.l.s4 1966171168
    %v1710 = vunpack.c.0.s8 %v1709
    %v1711 = vlaneseq
    %v1712 = vshrl.u32 %v1711, 7
    %v1713 = vsub.s32 %v1710, %v1712
    %v1714 = vrot.slane %v1695, %v1713
    %v1716 = vunpack.c.l.s4 1966171168
    %v1717 = vunpack.c.0.s8 %v1716
    %v1718 = vlaneseq
    %v1719 = vshrl.u32 %v1718, 7
    %v1720 = vsub.s32 %v1717, %v1719
    %v1721 = vrot.slane %v1694, %v1720
    %v1723 = vunpack.c.l.s4 1966171168
    %v1724 = vunpack.c.0.s8 %v1723
    %v1725 = vlaneseq
    %v1726 = vshrl.u32 %v1725, 7
    %v1727 = vsub.s32 %v1724, %v1726
    %v1728 = vrot.slane %v1696, %v1727
    %v1730 = vunpack.c.l.s4 1966171168
    %v1731 = vunpack.c.0.s8 %v1730
    %v1732 = vlaneseq
    %v1733 = vshrl.u32 %v1732, 7
    %v1734 = vsub.s32 %v1731, %v1733
    %v1735 = vrot.slane %v1697, %v1734
    %v1737 = vunpack.c.l.s4 1966171168
    %v1738 = vunpack.c.0.s8 %v1737
    %v1739 = vlaneseq
    %v1740 = vshrl.u32 %v1739, 7
    %v1741 = vsub.s32 %v1738, %v1740
    %v1742 = vrot.slane %v1699, %v1741
    %v1744 = vunpack.c.l.s4 1966171168
    %v1745 = vunpack.c.0.s8 %v1744
    %v1746 = vlaneseq
    %v1747 = vshrl.u32 %v1746, 7
    %v1748 = vsub.s32 %v1745, %v1747
    %v1749 = vrot.slane %v1698, %v1748
    %v1751 = vunpack.c.l.s4 1966171168
    %v1752 = vunpack.c.0.s8 %v1751
    %v1753 = vlaneseq
    %v1754 = vshrl.u32 %v1753, 7
    %v1755 = vsub.s32 %v1752, %v1754
    %v1756 = vrot.slane %v1700, %v1755
    %v1757 = vcombine.low %v1707, %v1735
    %v1758 = vcombine.high %v1707, %v1735
    %v1759 = vcombine.low %v1714, %v1742
    %v1760 = vcombine.high %v1714, %v1742
    %v1761 = vcombine.low %v1721, %v1749
    %v1762 = vcombine.high %v1721, %v1749
    %v1763 = vcombine.low %v1728, %v1756
    %v1764 = vcombine.high %v1728, %v1756
    %1773 = vst [vmem:[#allocation6] sm:$0xff] %v1757
    %1774 = vst [vmem:[#allocation6 + $0x8] sm:$0xff] %v1761
    %1775 = vst [vmem:[#allocation6 + $0x10] sm:$0xff] %v1758
    %1776 = vst [vmem:[#allocation6 + $0x18] sm:$0xff] %v1762
    %1777 = vst [vmem:[#allocation6 + $0x20] sm:$0xff] %v1759
    %1778 = vst [vmem:[#allocation6 + $0x28] sm:$0xff] %v1763
    %1779 = vst [vmem:[#allocation6 + $0x30] sm:$0xff] %v1760
    %1780 = vst [vmem:[#allocation6 + $0x38] sm:$0xff] %v1764
    // Predicated region
    $region30: #{autoencoder_forward.1} parent=1 // pred_check
      _
    $region31: #{autoencoder_forward.1} parent=1 // pred_check_branch
      %1782 = sbr.rel (0) target = $region33
    $region32: #{autoencoder_forward.1} parent=1 // pred_region
      // Predicated region
      $region34: #{autoencoder_forward.1} parent=32 // pred_check
        _
      $region35: #{autoencoder_forward.1} parent=32 // pred_check_branch
        %1784 = sbr.rel (0) target = $region37
      $region36: #{autoencoder_forward.1} parent=32 // pred_region
        // Predicated region
        $region38: #{autoencoder_forward.1} parent=36 // pred_check
          _
        $region39: #{autoencoder_forward.1} parent=36 // pred_check_branch
          %1786 = sbr.rel (0) target = $region41
        $region40: #{autoencoder_forward.1} parent=36 // pred_region
          // Predicated region
          $region53: #{autoencoder_forward.1} parent=40 // pred_check
            _
          $region54: #{autoencoder_forward.1} parent=40 // pred_check_branch
            %1801 = sbr.rel (0) target = $region56
          $region55: #{autoencoder_forward.1} parent=40 // pred_region
            loop: start=0, step=1, limit=1
            $region57: #{autoencoder_forward.1} parent=55 // loop_pre_header
              _
            $region58: #{autoencoder_forward.1} parent=55 // loop_header
              %s1803 = sphi 0, %s1807
              %p1804 = scmp.ge.s32.totalorder %s1803, 1
              %s1808 = sphi [#allocation6], [#allocation6]
              %s1809 = sphi %s5, %s5
            $region59: #{autoencoder_forward.1} parent=55 // loop_header_branch
              %1806 = sbr.rel (%p1804) target = $region63
            $region60: #{autoencoder_forward.1} parent=55 // loop_body
              %v1810 = vld [vmem:[%s1808] sm:$0xff]
              %1811 = vst [vmem:[%s1809] sm:$0xff] %v1810
            $region61: #{autoencoder_forward.1} parent=55 // loop_footer
              %s1807 = sadd.s32 1, %s1803
            $region62: #{autoencoder_forward.1} parent=55 // loop_footer_branch
              %1802 = sbr.rel target = $region58
            $region63: #{autoencoder_forward.1} parent=55 // loop_exit
              _
          $region56: #{autoencoder_forward.1} parent=40 // pred_fallthru
            _
          // Predicated region
          $region64: #{autoencoder_forward.1} parent=40 // pred_check
            _
          $region65: #{autoencoder_forward.1} parent=40 // pred_check_branch
            %1813 = sbr.rel target = $region67
          $region66: #{autoencoder_forward.1} parent=40 // pred_region
            _
          $region67: #{autoencoder_forward.1} parent=40 // pred_fallthru
            _
        $region41: #{autoencoder_forward.1} parent=36 // pred_fallthru
          _
        // Predicated region
        $region42: #{autoencoder_forward.1} parent=36 // pred_check
          _
        $region43: #{autoencoder_forward.1} parent=36 // pred_check_branch
          %1788 = sbr.rel target = $region45
        $region44: #{autoencoder_forward.1} parent=36 // pred_region
          loop: start=0, step=1, limit=1
          $region46: #{autoencoder_forward.1} parent=44 // loop_pre_header
            _
          $region47: #{autoencoder_forward.1} parent=44 // loop_header
            %s1791 = sphi 0, %s1795
            %p1792 = scmp.ge.s32.totalorder %s1791, 1
            %s1796 = sphi [#allocation6], [#allocation6]
            %s1797 = sphi %s5, %s5
          $region48: #{autoencoder_forward.1} parent=44 // loop_header_branch
            %1794 = sbr.rel (%p1792) target = $region52
          $region49: #{autoencoder_forward.1} parent=44 // loop_body
            %v1798 = vld [vmem:[%s1796] sm:$0xff]
            %1799 = vst [vmem:[%s1797] sm:$0xff] %v1798
          $region50: #{autoencoder_forward.1} parent=44 // loop_footer
            %s1795 = sadd.s32 1, %s1791
          $region51: #{autoencoder_forward.1} parent=44 // loop_footer_branch
            %1790 = sbr.rel target = $region47
          $region52: #{autoencoder_forward.1} parent=44 // loop_exit
            _
        $region45: #{autoencoder_forward.1} parent=36 // pred_fallthru
          _
      $region37: #{autoencoder_forward.1} parent=32 // pred_fallthru
        _
      %1814 = vnop
    $region33: #{autoencoder_forward.1} parent=1 // pred_fallthru
      _
    // Predicated region
    $region68: #{autoencoder_forward.1} parent=1 // pred_check
      _
    $region69: #{autoencoder_forward.1} parent=1 // pred_check_branch
      %1816 = sbr.rel (0) target = $region71
    $region70: #{autoencoder_forward.1} parent=1 // pred_region
      _
    $region71: #{autoencoder_forward.1} parent=1 // pred_fallthru
      _
    %1817 = vsyncpa [#allocation3], 1
    %1818 = vsyncpa [#allocation5], 1

</llo_original>
